<compile_context>
chip_gen: v5e
topology: v5e:2x2
jax: 0.10.0
libtpu: 0.0.40
codegen_flags: <defaults>
</compile_context>

<pallas_src>
import jax
import jax.numpy as jnp
from jax import lax
from jax.experimental import pallas as pl
from jax.experimental.pallas import tpu as pltpu


def _segment_loss_kernel(x_ref, t_ref,
                         w1_ref, b1_ref, w2_ref, b2_ref, w3_ref, b3_ref,
                         total_ref, count_ref):
    # Descriptor arrives in its native dtype; cast matmul operands to bf16 (MXU-native
    # on v5e/v6e/v7x) while keeping f32 accumulation and f32 VPU/EUP math.
    x = x_ref[...].astype(jnp.bfloat16)                                   # [TM, F]

    h1 = jnp.dot(x, w1_ref[...], preferred_element_type=jnp.float32) + b1_ref[...]
    h1 = jnp.maximum(h1, 0.0)                                             # [TM, 256] f32
    h2 = jnp.dot(h1.astype(jnp.bfloat16), w2_ref[...],
                 preferred_element_type=jnp.float32) + b2_ref[...]
    h2 = jnp.maximum(h2, 0.0)                                             # [TM, 64] f32
    logits = jnp.dot(h2.astype(jnp.bfloat16), w3_ref[...],
                     preferred_element_type=jnp.float32) + b3_ref[...]    # [TM, C] f32

    # log_softmax over class axis (class axis stays on lanes; single-vreg reductions).
    m = jnp.max(logits, axis=1, keepdims=True)
    z = logits - m
    lse = jnp.log(jnp.sum(jnp.exp(z), axis=1, keepdims=True))
    logp = z - lse                                                        # [TM, C]

    # NLL via one-hot gather + validity masking (== boolean filter + mean in PyTorch).
    tgt = t_ref[...]                                                      # [TM, 1] int32
    valid = tgt > -1                                                      # [TM, 1] bool
    tgt_safe = jnp.where(valid, tgt, 0)                                   # clamp invalid rows
    cls_ids = lax.broadcasted_iota(jnp.int32, logp.shape, 1)              # [TM, C]
    onehot = (cls_ids == tgt_safe).astype(jnp.float32)                    # [TM, C]
    nll = -jnp.sum(onehot * logp, axis=1, keepdims=True)                  # [TM, 1]

    validf = valid.astype(jnp.float32)
    tot = jnp.sum(nll * validf)
    cnt = jnp.sum(validf)
    # Broadcast scalars over the full (1, 8, 128) output block -> unmasked vector stores.
    total_ref[...] = jnp.broadcast_to(tot, total_ref.shape)
    count_ref[...] = jnp.broadcast_to(cnt, count_ref.shape)


def segment_loss_pallas(descriptor, target, params, *, tile_rows=256):
    """descriptor: [N, feat_dim] float32, target: [N] int (-1 = ignore)."""
    w1, b1, w2, b2, w3, b3 = params
    n, feat = descriptor.shape

    tm = tile_rows
    num_tiles = pl.cdiv(n, tm)
    n_pad = num_tiles * tm
    pad = n_pad - n
    if pad:
        # Padded rows get target = -1 so the validity mask drops them exactly.
        descriptor = jnp.pad(descriptor, ((0, pad), (0, 0)))
        target = jnp.pad(target, (0, pad), constant_values=-1)
    t2 = target.astype(jnp.int32).reshape(n_pad, 1)

    # Weights are tiny and grid-resident: store them bf16 for the MXU; biases stay f32.
    w1b, w2b, w3b = (w.astype(jnp.bfloat16) for w in (w1, w2, w3))

    grid_spec = pltpu.PrefetchScalarGridSpec(
        num_scalar_prefetch=0,
        grid=(num_tiles,),
        in_specs=[
            pl.BlockSpec((tm, feat), lambda i: (i, 0)),     # descriptor row tile
            pl.BlockSpec((tm, 1), lambda i: (i, 0)),        # target row tile
            pl.BlockSpec(w1b.shape, lambda i: (0, 0)),      # resident weights / biases
            pl.BlockSpec(b1.shape, lambda i: (0, 0)),
            pl.BlockSpec(w2b.shape, lambda i: (0, 0)),
            pl.BlockSpec(b2.shape, lambda i: (0, 0)),
            pl.BlockSpec(w3b.shape, lambda i: (0, 0)),
            pl.BlockSpec(b3.shape, lambda i: (0, 0)),
        ],
        out_specs=[
            pl.BlockSpec((1, 8, 128), lambda i: (i, 0, 0)),  # per-tile sum of NLL
            pl.BlockSpec((1, 8, 128), lambda i: (i, 0, 0)),  # per-tile valid count
        ],
    )

    totals, counts = pl.pallas_call(
        _segment_loss_kernel,
        out_shape=(jax.ShapeDtypeStruct((num_tiles, 8, 128), jnp.float32),
                   jax.ShapeDtypeStruct((num_tiles, 8, 128), jnp.float32)),
        grid_spec=grid_spec,
        compiler_params=pltpu.CompilerParams(
            dimension_semantics=("parallel",),
            vmem_limit_bytes=32 * 1024 * 1024,
        ),
    )(descriptor, t2, w1b, b1, w2b, b2, w3b, b3)

    total = jnp.sum(totals[:, 0, 0])
    count = jnp.sum(counts[:, 0, 0])
    return jnp.where(count > 0, total / count, jnp.float32(0.0))


def init_params(key, feat_dim=256, n_classes=6):
    """Deterministic synthetic init: Linear(feat,256), Linear(256,64), Linear(64,n_classes)."""
    ks = jax.random.split(key, 6)

    def lin(kw, kb, fan_in, fan_out):
        bound = 1.0 / jnp.sqrt(fan_in)
        w = jax.random.uniform(kw, (fan_in, fan_out), jnp.float32, -bound, bound)
        b = jax.random.uniform(kb, (1, fan_out), jnp.float32, -bound, bound)
        return w, b

    w1, b1 = lin(ks[0], ks[1], feat_dim, 256)
    w2, b2 = lin(ks[2], ks[3], 256, 64)
    w3, b3 = lin(ks[4], ks[5], 64, n_classes)
    return (w1, b1, w2, b2, w3, b3)


def _reference(descriptor, target, params):
    """Pure-JAX f32 reference: boolean-filter valid rows, classifier, NLL mean."""
    w1, b1, w2, b2, w3, b3 = params
    valid = target > -1
    x = descriptor[valid]
    t = target[valid]
    h1 = jnp.maximum(x @ w1 + b1, 0.0)
    h2 = jnp.maximum(h1 @ w2 + b2, 0.0)
    logits = h2 @ w3 + b3
    logp = jax.nn.log_softmax(logits, axis=1)
    return -jnp.mean(logp[jnp.arange(t.shape[0]), t])


if __name__ == "__main__":
    key = jax.random.PRNGKey(0)
    k_param, k_x, k_t = jax.random.split(key, 3)

    N, FEAT, NCLS = 600, 256, 6   # N not a tile multiple -> exercises padding path
    params = init_params(k_param, feat_dim=FEAT, n_classes=NCLS)

    descriptor = jax.random.normal(k_x, (N, FEAT), jnp.float32)
    # targets in [-1, n_classes-1]; -1 marks rows to ignore
    target = jax.random.randint(k_t, (N,), -1, NCLS, dtype=jnp.int32)

    loss = segment_loss_pallas(descriptor, target, params)
    jax.block_until_ready(loss)

    ref = _reference(descriptor, target, params)
    # bf16 MXU operands (f32 accumulate) vs f32 reference -> loose tolerance
    assert jnp.allclose(loss, ref, atol=2e-2, rtol=2e-2), (loss, ref)

    print("KERNEL_OK")
</pallas_src>

<mosaic_0001>
module attributes {stable_mosaic.version = 11 : i64} {
  func.func @_segment_loss_kernel(%arg0: i32, %arg1: memref<256x256xf32, #tpu.memory_space<vmem>>, %arg2: memref<256x1xi32, #tpu.memory_space<vmem>>, %arg3: memref<256x256xbf16, #tpu.memory_space<vmem>>, %arg4: memref<1x256xf32, #tpu.memory_space<vmem>>, %arg5: memref<256x64xbf16, #tpu.memory_space<vmem>>, %arg6: memref<1x64xf32, #tpu.memory_space<vmem>>, %arg7: memref<64x6xbf16, #tpu.memory_space<vmem>>, %arg8: memref<1x6xf32, #tpu.memory_space<vmem>>, %arg9: memref<1x8x128xf32, #tpu.memory_space<vmem>>, %arg10: memref<1x8x128xf32, #tpu.memory_space<vmem>>) attributes {dimension_semantics = [#tpu.dimension_semantics<parallel>], iteration_bounds = array<i64: 3>, scalar_prefetch = 0 : i64, scratch_operands = 0 : i64, tpu.core_type = #tpu.core_type<tc>, window_params = [{transform_indices = @transform_0, window_bounds = array<i64: 256, 256>}, {transform_indices = @transform_1, window_bounds = array<i64: 256, 1>}, {pipeline_mode = #tpu.pipeline_mode<synchronous>, transform_indices = @transform_2, window_bounds = array<i64: 256, 256>}, {pipeline_mode = #tpu.pipeline_mode<synchronous>, transform_indices = @transform_3, window_bounds = array<i64: 1, 256>}, {pipeline_mode = #tpu.pipeline_mode<synchronous>, transform_indices = @transform_4, window_bounds = array<i64: 256, 64>}, {pipeline_mode = #tpu.pipeline_mode<synchronous>, transform_indices = @transform_5, window_bounds = array<i64: 1, 64>}, {pipeline_mode = #tpu.pipeline_mode<synchronous>, transform_indices = @transform_6, window_bounds = array<i64: 64, 6>}, {pipeline_mode = #tpu.pipeline_mode<synchronous>, transform_indices = @transform_7, window_bounds = array<i64: 1, 6>}, {transform_indices = @transform_8, window_bounds = array<i64: 1, 8, 128>}, {transform_indices = @transform_9, window_bounds = array<i64: 1, 8, 128>}]} {
    %c0 = arith.constant 0 : index
    %c0_0 = arith.constant 0 : index
    %0 = vector.load %arg1[%c0, %c0_0] : memref<256x256xf32, #tpu.memory_space<vmem>>, vector<256x256xf32>
    %1 = arith.truncf %0 : vector<256x256xf32> to vector<256x256xbf16>
    %c0_1 = arith.constant 0 : index
    %c0_2 = arith.constant 0 : index
    %2 = vector.load %arg3[%c0_1, %c0_2] : memref<256x256xbf16, #tpu.memory_space<vmem>>, vector<256x256xbf16>
    %cst = arith.constant dense<0.000000e+00> : vector<256x256xf32>
    %3 = tpu.matmul %1, %2, %cst {dimension_numbers = #tpu.dot_dimension_numbers<[1], [0], [0], [1], [0, 0, 1, 1], [], []>} : vector<256x256xbf16>, vector<256x256xbf16>, vector<256x256xf32> -> vector<256x256xf32>
    %c0_3 = arith.constant 0 : index
    %c0_4 = arith.constant 0 : index
    %4 = vector.load %arg4[%c0_3, %c0_4] : memref<1x256xf32, #tpu.memory_space<vmem>>, vector<1x256xf32>
    %5 = vector.broadcast %4 : vector<1x256xf32> to vector<256x256xf32>
    %6 = arith.addf %3, %5 : vector<256x256xf32>
    %cst_5 = arith.constant 0.000000e+00 : f32
    %7 = vector.broadcast %cst_5 : f32 to vector<256x256xf32>
    %8 = arith.maximumf %6, %7 : vector<256x256xf32>
    %9 = arith.truncf %8 : vector<256x256xf32> to vector<256x256xbf16>
    %c0_6 = arith.constant 0 : index
    %c0_7 = arith.constant 0 : index
    %10 = vector.load %arg5[%c0_6, %c0_7] : memref<256x64xbf16, #tpu.memory_space<vmem>>, vector<256x64xbf16>
    %cst_8 = arith.constant dense<0.000000e+00> : vector<256x64xf32>
    %11 = tpu.matmul %9, %10, %cst_8 {dimension_numbers = #tpu.dot_dimension_numbers<[1], [0], [0], [1], [0, 0, 1, 1], [], []>} : vector<256x256xbf16>, vector<256x64xbf16>, vector<256x64xf32> -> vector<256x64xf32>
    %c0_9 = arith.constant 0 : index
    %c0_10 = arith.constant 0 : index
    %12 = vector.load %arg6[%c0_9, %c0_10] : memref<1x64xf32, #tpu.memory_space<vmem>>, vector<1x64xf32>
    %13 = vector.broadcast %12 : vector<1x64xf32> to vector<256x64xf32>
    %14 = arith.addf %11, %13 : vector<256x64xf32>
    %cst_11 = arith.constant 0.000000e+00 : f32
    %15 = vector.broadcast %cst_11 : f32 to vector<256x64xf32>
    %16 = arith.maximumf %14, %15 : vector<256x64xf32>
    %17 = arith.truncf %16 : vector<256x64xf32> to vector<256x64xbf16>
    %c0_12 = arith.constant 0 : index
    %c0_13 = arith.constant 0 : index
    %18 = vector.load %arg7[%c0_12, %c0_13] : memref<64x6xbf16, #tpu.memory_space<vmem>>, vector<64x6xbf16>
    %cst_14 = arith.constant dense<0.000000e+00> : vector<256x6xf32>
    %19 = tpu.matmul %17, %18, %cst_14 {dimension_numbers = #tpu.dot_dimension_numbers<[1], [0], [0], [1], [0, 0, 1, 1], [], []>} : vector<256x64xbf16>, vector<64x6xbf16>, vector<256x6xf32> -> vector<256x6xf32>
    %c0_15 = arith.constant 0 : index
    %c0_16 = arith.constant 0 : index
    %20 = vector.load %arg8[%c0_15, %c0_16] : memref<1x6xf32, #tpu.memory_space<vmem>>, vector<1x6xf32>
    %21 = vector.broadcast %20 : vector<1x6xf32> to vector<256x6xf32>
    %22 = arith.addf %19, %21 : vector<256x6xf32>
    %cst_17 = arith.constant dense<0xFF800000> : vector<256xf32>
    %23 = vector.multi_reduction <maximumf>, %22, %cst_17 [1] : vector<256x6xf32> to vector<256xf32>
    %24 = vector.shape_cast %23 : vector<256xf32> to vector<256x1xf32>
    %25 = vector.broadcast %24 : vector<256x1xf32> to vector<256x6xf32>
    %26 = arith.subf %22, %25 : vector<256x6xf32>
    %27 = math.exp %26 : vector<256x6xf32>
    %cst_18 = arith.constant dense<0.000000e+00> : vector<256xf32>
    %28 = vector.multi_reduction <add>, %27, %cst_18 [1] : vector<256x6xf32> to vector<256xf32>
    %29 = vector.shape_cast %28 : vector<256xf32> to vector<256x1xf32>
    %30 = math.log %29 : vector<256x1xf32>
    %31 = vector.broadcast %30 : vector<256x1xf32> to vector<256x6xf32>
    %32 = arith.subf %26, %31 : vector<256x6xf32>
    %c0_19 = arith.constant 0 : index
    %c0_20 = arith.constant 0 : index
    %33 = vector.load %arg2[%c0_19, %c0_20] : memref<256x1xi32, #tpu.memory_space<vmem>>, vector<256x1xi32>
    %c-1_i32 = arith.constant -1 : i32
    %34 = vector.broadcast %c-1_i32 : i32 to vector<256x1xi32>
    %35 = arith.cmpi sgt, %33, %34 : vector<256x1xi32>
    %c0_i32 = arith.constant 0 : i32
    %36 = vector.broadcast %c0_i32 : i32 to vector<256x1xi32>
    %37 = arith.select %35, %33, %36 : vector<256x1xi1>, vector<256x1xi32>
    %38 = tpu.iota {dimensions = array<i32: 1>} : vector<256x6xi32>
    %39 = vector.broadcast %37 : vector<256x1xi32> to vector<256x6xi32>
    %40 = arith.cmpi eq, %38, %39 : vector<256x6xi32>
    %41 = arith.extui %40 : vector<256x6xi1> to vector<256x6xi32>
    %42 = arith.sitofp %41 : vector<256x6xi32> to vector<256x6xf32>
    %43 = arith.mulf %42, %32 : vector<256x6xf32>
    %cst_21 = arith.constant dense<0.000000e+00> : vector<256xf32>
    %44 = vector.multi_reduction <add>, %43, %cst_21 [1] : vector<256x6xf32> to vector<256xf32>
    %45 = vector.shape_cast %44 : vector<256xf32> to vector<256x1xf32>
    %cst_22 = arith.constant 0.000000e+00 : f32
    %46 = vector.broadcast %cst_22 : f32 to vector<256x1xf32>
    %47 = arith.subf %46, %45 : vector<256x1xf32>
    %48 = arith.extui %35 : vector<256x1xi1> to vector<256x1xi32>
    %49 = arith.sitofp %48 : vector<256x1xi32> to vector<256x1xf32>
    %50 = arith.mulf %47, %49 : vector<256x1xf32>
    %51 = vector.shape_cast %50 : vector<256x1xf32> to vector<1x256x1xf32>
    %cst_23 = arith.constant dense<0.000000e+00> : vector<1xf32>
    %52 = vector.multi_reduction <add>, %51, %cst_23 [1, 2] : vector<1x256x1xf32> to vector<1xf32>
    %53 = vector.shape_cast %52 : vector<1xf32> to vector<1x1x1xf32>
    %54 = vector.extract %53[0, 0, 0] : f32 from vector<1x1x1xf32>
    %55 = vector.shape_cast %49 : vector<256x1xf32> to vector<1x256x1xf32>
    %cst_24 = arith.constant dense<0.000000e+00> : vector<1xf32>
    %56 = vector.multi_reduction <add>, %55, %cst_24 [1, 2] : vector<1x256x1xf32> to vector<1xf32>
    %57 = vector.shape_cast %56 : vector<1xf32> to vector<1x1x1xf32>
    %58 = vector.extract %57[0, 0, 0] : f32 from vector<1x1x1xf32>
    %59 = vector.broadcast %54 : f32 to vector<1x8x128xf32>
    %c0_25 = arith.constant 0 : index
    %c0_26 = arith.constant 0 : index
    %c0_27 = arith.constant 0 : index
    %60 = vector.load %arg9[%c0_25, %c0_26, %c0_27] : memref<1x8x128xf32, #tpu.memory_space<vmem>>, vector<1x8x128xf32>
    tpu.vector_store %arg9[%c0_25, %c0_26, %c0_27], %59 {strides = array<i32>} : memref<1x8x128xf32, #tpu.memory_space<vmem>>, vector<1x8x128xf32>,
    %61 = vector.broadcast %58 : f32 to vector<1x8x128xf32>
    %c0_28 = arith.constant 0 : index
    %c0_29 = arith.constant 0 : index
    %c0_30 = arith.constant 0 : index
    %62 = vector.load %arg10[%c0_28, %c0_29, %c0_30] : memref<1x8x128xf32, #tpu.memory_space<vmem>>, vector<1x8x128xf32>
    tpu.vector_store %arg10[%c0_28, %c0_29, %c0_30], %61 {strides = array<i32>} : memref<1x8x128xf32, #tpu.memory_space<vmem>>, vector<1x8x128xf32>,
    return
  }
  func.func @transform_0(%arg0: i32) -> (i32, i32) {
    %c0_i32 = arith.constant 0 : i32
    %c0_i32_0 = arith.constant 0 : i32
    return %arg0, %c0_i32 : i32, i32
  }
  func.func @transform_1(%arg0: i32) -> (i32, i32) {
    %c0_i32 = arith.constant 0 : i32
    %c0_i32_0 = arith.constant 0 : i32
    return %arg0, %c0_i32 : i32, i32
  }
  func.func @transform_2(%arg0: i32) -> (i32, i32) {
    %c0_i32 = arith.constant 0 : i32
    %c0_i32_0 = arith.constant 0 : i32
    %c0_i32_1 = arith.constant 0 : i32
    return %c0_i32, %c0_i32_0 : i32, i32
  }
  func.func @transform_3(%arg0: i32) -> (i32, i32) {
    %c0_i32 = arith.constant 0 : i32
    %c0_i32_0 = arith.constant 0 : i32
    %c0_i32_1 = arith.constant 0 : i32
    return %c0_i32, %c0_i32_0 : i32, i32
  }
  func.func @transform_4(%arg0: i32) -> (i32, i32) {
    %c0_i32 = arith.constant 0 : i32
    %c0_i32_0 = arith.constant 0 : i32
    %c0_i32_1 = arith.constant 0 : i32
    return %c0_i32, %c0_i32_0 : i32, i32
  }
  func.func @transform_5(%arg0: i32) -> (i32, i32) {
    %c0_i32 = arith.constant 0 : i32
    %c0_i32_0 = arith.constant 0 : i32
    %c0_i32_1 = arith.constant 0 : i32
    return %c0_i32, %c0_i32_0 : i32, i32
  }
  func.func @transform_6(%arg0: i32) -> (i32, i32) {
    %c0_i32 = arith.constant 0 : i32
    %c0_i32_0 = arith.constant 0 : i32
    %c0_i32_1 = arith.constant 0 : i32
    return %c0_i32, %c0_i32_0 : i32, i32
  }
  func.func @transform_7(%arg0: i32) -> (i32, i32) {
    %c0_i32 = arith.constant 0 : i32
    %c0_i32_0 = arith.constant 0 : i32
    %c0_i32_1 = arith.constant 0 : i32
    return %c0_i32, %c0_i32_0 : i32, i32
  }
  func.func @transform_8(%arg0: i32) -> (i32, i32, i32) {
    %c0_i32 = arith.constant 0 : i32
    %c0_i32_0 = arith.constant 0 : i32
    %c0_i32_1 = arith.constant 0 : i32
    return %arg0, %c0_i32, %c0_i32_0 : i32, i32, i32
  }
  func.func @transform_9(%arg0: i32) -> (i32, i32, i32) {
    %c0_i32 = arith.constant 0 : i32
    %c0_i32_0 = arith.constant 0 : i32
    %c0_i32_1 = arith.constant 0 : i32
    return %arg0, %c0_i32, %c0_i32_0 : i32, i32, i32
  }
}

</mosaic_0001>

<llo_original>
// kernel: tpu_custom_call.1
$region0: #{tpu_custom_call.1}
  #allocation0 [shape = 'u32[]', space=smem, size = 0x4, offset = 0x4, fixed_abs, tag = 'smem constant byte address 0x4 - core index']
  #allocation1 [shape = 'u32[72,128]{1,0:T(1,128)}', space=vmem, size = 0x9000, scoped, tag = 'internal scratch']
  %s0 = inlined_call_operand.hbm [shape: f32[768,256], index: 0, kind: input, shape index: {}]
  %s1 = inlined_call_operand.vmem [shape: s32[768,1], index: 1, kind: input, shape index: {}]
  %s2 = inlined_call_operand.vmem [shape: bf16[256,256], index: 2, kind: input, shape index: {}]
  %s3 = inlined_call_operand.vmem [shape: f32[1,256], index: 3, kind: input, shape index: {}]
  %s4 = inlined_call_operand.vmem [shape: bf16[256,64], index: 4, kind: input, shape index: {}]
  %s5 = inlined_call_operand.vmem [shape: f32[1,64], index: 5, kind: input, shape index: {}]
  %s6 = inlined_call_operand.vmem [shape: bf16[64,6], index: 6, kind: input, shape index: {}]
  %s7 = inlined_call_operand.vmem [shape: f32[1,6], index: 7, kind: input, shape index: {}]
  %s8 = inlined_call_operand.hbm [shape: f32[3,8,128], index: 8, kind: output, shape index: {0}]
  %s9 = inlined_call_operand.hbm [shape: f32[3,8,128], index: 9, kind: output, shape index: {1}]
  %10 = xla_tuple %s8, %s9
  %s11 = sld [smem:[#allocation0]]
  $region77: #{tpu_custom_call.1} parent=0
    _
  %s13 = ssub.s32 1, %s11
  %s14 = scalar_select 0, %s13, %s11
  $region1: #{tpu_custom_call.1} parent=0
    #allocation2 [shape = 'u8[524288]{0}', space=vmem, size = 0x80000, scoped, tag = 'input window, operand 0']
    #allocation3 [shape = 's32[2]{0}', space=sflag, size = 0x8, scoped, tag = 'scoped memory for tpu_custom_call.1']
    #allocation4 [shape = 's32[2]{0}', space=sflag, size = 0x8, scoped, tag = 'scoped memory for tpu_custom_call.1']
    #allocation5 [shape = 'u8[8192]{0}', space=vmem, size = 0x2000, scoped, tag = 'output window, operand 0']
    #allocation6 [shape = 'u8[8192]{0}', space=vmem, size = 0x2000, scoped, tag = 'output window, operand 1']
    #allocation7 [shape = 's32[2]{0}', space=sflag, size = 0x8, scoped, tag = 'scoped memory for tpu_custom_call.1']
    %15 = vsyncpa [#allocation3], 0
    %s16 = scalar_lea.sflag [#allocation3], 1
    %17 = vsyncpa %s16, 0
    %18 = vsyncpa [#allocation4], 0
    %s19 = scalar_lea.sflag [#allocation4], 1
    %20 = vsyncpa %s19, 0
    %21 = vsyncpa [#allocation7], 0
    %s22 = scalar_lea.sflag [#allocation7], 1
    %23 = vsyncpa %s22, 0
    loop: start=0, step=1, limit=5
    $region2: #{tpu_custom_call.1} parent=1 // loop_pre_header
      _
    $region3: #{tpu_custom_call.1} parent=1 // loop_header
      %s25 = sphi 0, %s29
      %p26 = scmp.ge.s32.totalorder %s25, 5
      %s35 = sphi 0, %s37
      %s38 = sphi 0, %s35
      %s39 = sphi 0, %s38
      %s55 = sphi 0, %s39
      %s61 = sphi 0, %s63
      %s64 = sphi 0, %s61
      %s65 = sphi 0, %s64
      %s81 = sphi 0, %s65
      %s85 = sphi 0, %s85
      %s87 = sphi 0, %s85
      %s88 = sphi 0, %s87
      %s102 = sphi 0, %s88
      %s106 = sphi 0, %s106
      %s108 = sphi 0, %s106
      %s109 = sphi 0, %s108
      %s123 = sphi 0, %s109
      %s127 = sphi 0, %s127
      %s129 = sphi 0, %s127
      %s130 = sphi 0, %s129
      %s144 = sphi 0, %s130
      %s148 = sphi 0, %s148
      %s150 = sphi 0, %s148
      %s151 = sphi 0, %s150
      %s165 = sphi 0, %s151
      %s169 = sphi 0, %s169
      %s171 = sphi 0, %s169
      %s172 = sphi 0, %s171
      %s186 = sphi 0, %s172
      %s190 = sphi 0, %s190
      %s192 = sphi 0, %s190
      %s193 = sphi 0, %s192
      %s207 = sphi 0, %s193
      %s213 = sphi 0, %s215
      %s216 = sphi 0, %s213
      %s217 = sphi 0, %s216
      %s233 = sphi 0, %s217
      %s239 = sphi 0, %s241
      %s242 = sphi 0, %s239
      %s243 = sphi 0, %s242
      %s259 = sphi 0, %s243
    $region4: #{tpu_custom_call.1} parent=1 // loop_header_branch
      %28 = sbr.rel (%p26) target = $region8
    $region5: #{tpu_custom_call.1} parent=1 // loop_body
      %s30 = ssub.s32 %s25, 1
      %s31 = ssub.s32 %s25, 2
      %s32 = sadd.s32 %s25, 1
      %s33 = ssub.s32 %s25, %s32
      %p34 = scmp.eq.s32.totalorder %s33, 0
      %s36 = sadd.s32 %s35, 1
      %s37 = scalar_select %p34, %s35, %s36
      %p40 = pneg %p34
      %p41 = scmp.eq.s32.totalorder %s25, 2
      %p42 = por %p40, %p41
      %p43 = scmp.ne.s32.totalorder %s35, %s38
      %p44 = scmp.eq.s32.totalorder %s25, 0
      %p45 = por %p43, %p44
      %p46 = scmp.ne.s32.totalorder %s35, %s38
      %p47 = scmp.eq.s32.totalorder %s30, 2
      %p48 = por %p46, %p47
      %p49 = scmp.ne.s32.totalorder %s38, %s39
      %p50 = scmp.eq.s32.totalorder %s30, 0
      %p51 = por %p49, %p50
      %p52 = scmp.ne.s32.totalorder %s38, %s39
      %p53 = scmp.eq.s32.totalorder %s31, 2
      %p54 = por %p52, %p53
      %p56 = scmp.ne.s32.totalorder %s39, %s55
      %p57 = scmp.eq.s32.totalorder %s31, 0
      %p58 = por %p56, %p57
      %s59 = ssub.s32 %s25, %s32
      %p60 = scmp.eq.s32.totalorder %s59, 0
      %s62 = sadd.s32 %s61, 1
      %s63 = scalar_select %p60, %s61, %s62
      %p66 = pneg %p60
      %p67 = scmp.eq.s32.totalorder %s25, 2
      %p68 = por %p66, %p67
      %p69 = scmp.ne.s32.totalorder %s61, %s64
      %p70 = scmp.eq.s32.totalorder %s25, 0
      %p71 = por %p69, %p70
      %p72 = scmp.ne.s32.totalorder %s61, %s64
      %p73 = scmp.eq.s32.totalorder %s30, 2
      %p74 = por %p72, %p73
      %p75 = scmp.ne.s32.totalorder %s64, %s65
      %p76 = scmp.eq.s32.totalorder %s30, 0
      %p77 = por %p75, %p76
      %p78 = scmp.ne.s32.totalorder %s64, %s65
      %p79 = scmp.eq.s32.totalorder %s31, 2
      %p80 = por %p78, %p79
      %p82 = scmp.ne.s32.totalorder %s65, %s81
      %p83 = scmp.eq.s32.totalorder %s31, 0
      %p84 = por %p82, %p83
      %s86 = sadd.s32 %s85, 1
      %p89 = scmp.eq.s32.totalorder %s25, 2
      %p90 = scmp.ne.s32.totalorder %s85, %s87
      %p91 = scmp.eq.s32.totalorder %s25, 0
      %p92 = por %p90, %p91
      %p93 = scmp.ne.s32.totalorder %s85, %s87
      %p94 = scmp.eq.s32.totalorder %s30, 2
      %p95 = por %p93, %p94
      %p96 = scmp.ne.s32.totalorder %s87, %s88
      %p97 = scmp.eq.s32.totalorder %s30, 0
      %p98 = por %p96, %p97
      %p99 = scmp.ne.s32.totalorder %s87, %s88
      %p100 = scmp.eq.s32.totalorder %s31, 2
      %p101 = por %p99, %p100
      %p103 = scmp.ne.s32.totalorder %s88, %s102
      %p104 = scmp.eq.s32.totalorder %s31, 0
      %p105 = por %p103, %p104
      %s107 = sadd.s32 %s106, 1
      %p110 = scmp.eq.s32.totalorder %s25, 2
      %p111 = scmp.ne.s32.totalorder %s106, %s108
      %p112 = scmp.eq.s32.totalorder %s25, 0
      %p113 = por %p111, %p112
      %p114 = scmp.ne.s32.totalorder %s106, %s108
      %p115 = scmp.eq.s32.totalorder %s30, 2
      %p116 = por %p114, %p115
      %p117 = scmp.ne.s32.totalorder %s108, %s109
      %p118 = scmp.eq.s32.totalorder %s30, 0
      %p119 = por %p117, %p118
      %p120 = scmp.ne.s32.totalorder %s108, %s109
      %p121 = scmp.eq.s32.totalorder %s31, 2
      %p122 = por %p120, %p121
      %p124 = scmp.ne.s32.totalorder %s109, %s123
      %p125 = scmp.eq.s32.totalorder %s31, 0
      %p126 = por %p124, %p125
      %s128 = sadd.s32 %s127, 1
      %p131 = scmp.eq.s32.totalorder %s25, 2
      %p132 = scmp.ne.s32.totalorder %s127, %s129
      %p133 = scmp.eq.s32.totalorder %s25, 0
      %p134 = por %p132, %p133
      %p135 = scmp.ne.s32.totalorder %s127, %s129
      %p136 = scmp.eq.s32.totalorder %s30, 2
      %p137 = por %p135, %p136
      %p138 = scmp.ne.s32.totalorder %s129, %s130
      %p139 = scmp.eq.s32.totalorder %s30, 0
      %p140 = por %p138, %p139
      %p141 = scmp.ne.s32.totalorder %s129, %s130
      %p142 = scmp.eq.s32.totalorder %s31, 2
      %p143 = por %p141, %p142
      %p145 = scmp.ne.s32.totalorder %s130, %s144
      %p146 = scmp.eq.s32.totalorder %s31, 0
      %p147 = por %p145, %p146
      %s149 = sadd.s32 %s148, 1
      %p152 = scmp.eq.s32.totalorder %s25, 2
      %p153 = scmp.ne.s32.totalorder %s148, %s150
      %p154 = scmp.eq.s32.totalorder %s25, 0
      %p155 = por %p153, %p154
      %p156 = scmp.ne.s32.totalorder %s148, %s150
      %p157 = scmp.eq.s32.totalorder %s30, 2
      %p158 = por %p156, %p157
      %p159 = scmp.ne.s32.totalorder %s150, %s151
      %p160 = scmp.eq.s32.totalorder %s30, 0
      %p161 = por %p159, %p160
      %p162 = scmp.ne.s32.totalorder %s150, %s151
      %p163 = scmp.eq.s32.totalorder %s31, 2
      %p164 = por %p162, %p163
      %p166 = scmp.ne.s32.totalorder %s151, %s165
      %p167 = scmp.eq.s32.totalorder %s31, 0
      %p168 = por %p166, %p167
      %s170 = sadd.s32 %s169, 1
      %p173 = scmp.eq.s32.totalorder %s25, 2
      %p174 = scmp.ne.s32.totalorder %s169, %s171
      %p175 = scmp.eq.s32.totalorder %s25, 0
      %p176 = por %p174, %p175
      %p177 = scmp.ne.s32.totalorder %s169, %s171
      %p178 = scmp.eq.s32.totalorder %s30, 2
      %p179 = por %p177, %p178
      %p180 = scmp.ne.s32.totalorder %s171, %s172
      %p181 = scmp.eq.s32.totalorder %s30, 0
      %p182 = por %p180, %p181
      %p183 = scmp.ne.s32.totalorder %s171, %s172
      %p184 = scmp.eq.s32.totalorder %s31, 2
      %p185 = por %p183, %p184
      %p187 = scmp.ne.s32.totalorder %s172, %s186
      %p188 = scmp.eq.s32.totalorder %s31, 0
      %p189 = por %p187, %p188
      %s191 = sadd.s32 %s190, 1
      %p194 = scmp.eq.s32.totalorder %s25, 2
      %p195 = scmp.ne.s32.totalorder %s190, %s192
      %p196 = scmp.eq.s32.totalorder %s25, 0
      %p197 = por %p195, %p196
      %p198 = scmp.ne.s32.totalorder %s190, %s192
      %p199 = scmp.eq.s32.totalorder %s30, 2
      %p200 = por %p198, %p199
      %p201 = scmp.ne.s32.totalorder %s192, %s193
      %p202 = scmp.eq.s32.totalorder %s30, 0
      %p203 = por %p201, %p202
      %p204 = scmp.ne.s32.totalorder %s192, %s193
      %p205 = scmp.eq.s32.totalorder %s31, 2
      %p206 = por %p204, %p205
      %p208 = scmp.ne.s32.totalorder %s193, %s207
      %p209 = scmp.eq.s32.totalorder %s31, 0
      %p210 = por %p208, %p209
      %s211 = ssub.s32 %s25, %s32
      %p212 = scmp.eq.s32.totalorder %s211, 0
      %s214 = sadd.s32 %s213, 1
      %s215 = scalar_select %p212, %s213, %s214
      %p218 = pneg %p212
      %p219 = scmp.eq.s32.totalorder %s25, 2
      %p220 = por %p218, %p219
      %p221 = scmp.ne.s32.totalorder %s213, %s216
      %p222 = scmp.eq.s32.totalorder %s25, 0
      %p223 = por %p221, %p222
      %p224 = scmp.ne.s32.totalorder %s213, %s216
      %p225 = scmp.eq.s32.totalorder %s30, 2
      %p226 = por %p224, %p225
      %p227 = scmp.ne.s32.totalorder %s216, %s217
      %p228 = scmp.eq.s32.totalorder %s30, 0
      %p229 = por %p227, %p228
      %p230 = scmp.ne.s32.totalorder %s216, %s217
      %p231 = scmp.eq.s32.totalorder %s31, 2
      %p232 = por %p230, %p231
      %p234 = scmp.ne.s32.totalorder %s217, %s233
      %p235 = scmp.eq.s32.totalorder %s31, 0
      %p236 = por %p234, %p235
      %s237 = ssub.s32 %s25, %s32
      %p238 = scmp.eq.s32.totalorder %s237, 0
      %s240 = sadd.s32 %s239, 1
      %s241 = scalar_select %p238, %s239, %s240
      %p244 = pneg %p238
      %p245 = scmp.eq.s32.totalorder %s25, 2
      %p246 = por %p244, %p245
      %p247 = scmp.ne.s32.totalorder %s239, %s242
      %p248 = scmp.eq.s32.totalorder %s25, 0
      %p249 = por %p247, %p248
      %p250 = scmp.ne.s32.totalorder %s239, %s242
      %p251 = scmp.eq.s32.totalorder %s30, 2
      %p252 = por %p250, %p251
      %p253 = scmp.ne.s32.totalorder %s242, %s243
      %p254 = scmp.eq.s32.totalorder %s30, 0
      %p255 = por %p253, %p254
      %p256 = scmp.ne.s32.totalorder %s242, %s243
      %p257 = scmp.eq.s32.totalorder %s31, 2
      %p258 = por %p256, %p257
      %p260 = scmp.ne.s32.totalorder %s243, %s259
      %p261 = scmp.eq.s32.totalorder %s31, 0
      %p262 = por %p260, %p261
      %p263 = scmp.le.s32.totalorder 1, %s25
      %p264 = scmp.lt.s32.totalorder %s25, 4
      %p265 = pnand %p263, %p264
      %p266 = pneg %p265
      // Predicated region
      $region9: #{tpu_custom_call.1} parent=5 // pred_check
        _
      $region10: #{tpu_custom_call.1} parent=5 // pred_check_branch
        %268 = sbr.rel (%p265) target = $region12
      $region11: #{tpu_custom_call.1} parent=5 // pred_region
        %s269 = ssub.s32 %s25, 1
        // Predicated region
        $region13: #{tpu_custom_call.1} parent=11 // pred_check
          %p270 = pneg %p98
        $region14: #{tpu_custom_call.1} parent=11 // pred_check_branch
          %272 = sbr.rel (%p270) target = $region16
        $region15: #{tpu_custom_call.1} parent=11 // pred_region
          _
        $region16: #{tpu_custom_call.1} parent=11 // pred_fallthru
          _
        // Predicated region
        $region17: #{tpu_custom_call.1} parent=11 // pred_check
          %p273 = pneg %p119
        $region18: #{tpu_custom_call.1} parent=11 // pred_check_branch
          %275 = sbr.rel (%p273) target = $region20
        $region19: #{tpu_custom_call.1} parent=11 // pred_region
          _
        $region20: #{tpu_custom_call.1} parent=11 // pred_fallthru
          _
        // Predicated region
        $region21: #{tpu_custom_call.1} parent=11 // pred_check
          %p276 = pneg %p140
        $region22: #{tpu_custom_call.1} parent=11 // pred_check_branch
          %278 = sbr.rel (%p276) target = $region24
        $region23: #{tpu_custom_call.1} parent=11 // pred_region
          _
        $region24: #{tpu_custom_call.1} parent=11 // pred_fallthru
          _
        // Predicated region
        $region25: #{tpu_custom_call.1} parent=11 // pred_check
          %p279 = pneg %p161
        $region26: #{tpu_custom_call.1} parent=11 // pred_check_branch
          %281 = sbr.rel (%p279) target = $region28
        $region27: #{tpu_custom_call.1} parent=11 // pred_region
          _
        $region28: #{tpu_custom_call.1} parent=11 // pred_fallthru
          _
        // Predicated region
        $region29: #{tpu_custom_call.1} parent=11 // pred_check
          %p282 = pneg %p182
        $region30: #{tpu_custom_call.1} parent=11 // pred_check_branch
          %284 = sbr.rel (%p282) target = $region32
        $region31: #{tpu_custom_call.1} parent=11 // pred_region
          _
        $region32: #{tpu_custom_call.1} parent=11 // pred_fallthru
          _
        // Predicated region
        $region33: #{tpu_custom_call.1} parent=11 // pred_check
          %p285 = pneg %p203
        $region34: #{tpu_custom_call.1} parent=11 // pred_check_branch
          %287 = sbr.rel (%p285) target = $region36
        $region35: #{tpu_custom_call.1} parent=11 // pred_region
          _
        $region36: #{tpu_custom_call.1} parent=11 // pred_fallthru
          _
      $region12: #{tpu_custom_call.1} parent=5 // pred_fallthru
        _
      %p288 = scmp.lt.s32.totalorder %s25, 3
      // Predicated region
      $region37: #{tpu_custom_call.1} parent=5 // pred_check
        %p289 = pneg %p288
      $region38: #{tpu_custom_call.1} parent=5 // pred_check_branch
        %291 = sbr.rel (%p289) target = $region40
      $region39: #{tpu_custom_call.1} parent=5 // pred_region
        // Predicated region
        $region41: #{tpu_custom_call.1} parent=39 // pred_check
          %p292 = pneg %p45
        $region42: #{tpu_custom_call.1} parent=39 // pred_check_branch
          %294 = sbr.rel (%p292) target = $region44
        $region43: #{tpu_custom_call.1} parent=39 // pred_region
          %s295 = sand.u32 %s35, 1
          %s296 = scalar_lea.sflag [#allocation3], %s295
          %s297 = sand.u32 %s35, 1
          %s298 = smul.addr %s297, 512
          %s299 = scalar_lea.vmem [#allocation2], %s298
          %s300 = smul.u32 32, %s25
          %302 = vsyncadd %s296, 0
          %s303 = smul.addr %s300, 2
          %s304 = smul.addr %s303, 8
          %s305 = scalar_lea.hbm %s0, %s304
          %s306 = sshll.u32 %s305, 4
          %s307 = int_to_ptr.hbm [resolvable:$true] %s306
          %s308 = sshll.u32 %s299, 4
          %s309 = int_to_ptr.vmem [resolvable:$true] %s308
          %314 = dma.hbm_to_vmem [thread:$0]  %s307, 8192, %s309, %s296, 256, 256, 16
        $region44: #{tpu_custom_call.1} parent=39 // pred_fallthru
          _
        // Predicated region
        $region45: #{tpu_custom_call.1} parent=39 // pred_check
          %p315 = pneg %p71
        $region46: #{tpu_custom_call.1} parent=39 // pred_check_branch
          %317 = sbr.rel (%p315) target = $region48
        $region47: #{tpu_custom_call.1} parent=39 // pred_region
          %s318 = smul.u32 32, %s25
          %p319 = scmp.lt.s32.totalorder %s318, 95
          %s320 = scalar_select %p319, %s318, 95
          %s321 = smul.addr %s320, 8
          %s322 = scalar_lea.vmem %s1, %s321
          %s323 = smul.u32 32, %s25
        $region48: #{tpu_custom_call.1} parent=39 // pred_fallthru
          _
      $region40: #{tpu_custom_call.1} parent=5 // pred_fallthru
        _
      %p324 = scmp.le.s32.totalorder 1, %s25
      %p325 = scmp.lt.s32.totalorder %s25, 4
      %p326 = pnand %p324, %p325
      %p327 = pneg %p326
      // Predicated region
      $region49: #{tpu_custom_call.1} parent=5 // pred_check
        _
      $region50: #{tpu_custom_call.1} parent=5 // pred_check_branch
        %329 = sbr.rel (%p326) target = $region52
      $region51: #{tpu_custom_call.1} parent=5 // pred_region
        %s330 = ssub.s32 %s25, 1
        %s331 = sand.u32 %s38, 1
        %s332 = scalar_lea.sflag [#allocation3], %s331
        %s333 = sand.u32 %s38, 1
        %s334 = smul.addr %s333, 512
        %s335 = scalar_lea.vmem [#allocation2], %s334
        // Predicated region
        $region53: #{tpu_custom_call.1} parent=51 // pred_check
          %p336 = pneg %p51
        $region54: #{tpu_custom_call.1} parent=51 // pred_check_branch
          %338 = sbr.rel (%p336) target = $region56
        $region55: #{tpu_custom_call.1} parent=51 // pred_region
          %340 = dma.done %s332, 8192
        $region56: #{tpu_custom_call.1} parent=51 // pred_fallthru
          _
        %s341 = sand.u32 %s38, 1
        %s342 = scalar_lea.sflag [#allocation3], %s341
        %s343 = sand.u32 %s38, 1
        %s344 = smul.addr %s343, 512
        %s345 = scalar_lea.vmem [#allocation2], %s344
        %p346 = pneg %p51
        %p347 = pneg %p48
        %s348 = smul.u32 32, %s30
        %p349 = scmp.lt.s32.totalorder %s348, 95
        %s350 = scalar_select %p349, %s348, 95
        %s351 = smul.addr %s350, 8
        %s352 = scalar_lea.vmem %s1, %s351
        %p353 = pneg %p77
        %p354 = pneg %p74
        %p355 = pneg %p98
        %p356 = pneg %p95
        %p357 = pneg %p119
        %p358 = pneg %p116
        %p359 = pneg %p140
        %p360 = pneg %p137
        %p361 = pneg %p161
        %p362 = pneg %p158
        %p363 = pneg %p182
        %p364 = pneg %p179
        %p365 = pneg %p203
        %p366 = pneg %p200
        %p367 = pneg %p229
        %p368 = pneg %p226
        %s369 = sand.u32 %s216, 1
        %s370 = scalar_lea.sflag [#allocation4], %s369
        %s371 = sand.u32 %s216, 1
        %s372 = smul.addr %s371, 8
        %s373 = scalar_lea.vmem [#allocation5], %s372
        %p374 = pneg %p255
        %p375 = pneg %p252
        %s376 = sand.u32 %s242, 1
        %s377 = scalar_lea.sflag [#allocation7], %s376
        %s378 = sand.u32 %s242, 1
        %s379 = smul.addr %s378, 8
        %s380 = scalar_lea.vmem [#allocation6], %s379
        %s381 = smul.u32 32, %s30
        %s382 = smul.u32 32, %s30
        %p383 = scmp.lt.s32.totalorder %s382, 95
        %s384 = scalar_select %p383, %s382, 95
        %s385 = smul.addr %s384, 8
        %s386 = scalar_lea.vmem %s1, %s385
        %s387 = smul.u32 32, %s30
        %v389 = vld [vmem:[%s335] sm:$0xff]
        %v390 = vld [vmem:[%s335 + $0x8] sm:$0xff]
        %v391 = vld [vmem:[%s335 + $0x10] sm:$0xff]
        %v392 = vld [vmem:[%s335 + $0x18] sm:$0xff]
        %v393 = vld [vmem:[%s335 + $0x20] sm:$0xff]
        %v394 = vld [vmem:[%s335 + $0x28] sm:$0xff]
        %v395 = vld [vmem:[%s335 + $0x30] sm:$0xff]
        %v396 = vld [vmem:[%s335 + $0x38] sm:$0xff]
        %v397 = vld [vmem:[%s335 + $0x40] sm:$0xff]
        %v398 = vld [vmem:[%s335 + $0x48] sm:$0xff]
        %v399 = vld [vmem:[%s335 + $0x50] sm:$0xff]
        %v400 = vld [vmem:[%s335 + $0x58] sm:$0xff]
        %v401 = vld [vmem:[%s335 + $0x60] sm:$0xff]
        %v402 = vld [vmem:[%s335 + $0x68] sm:$0xff]
        %v403 = vld [vmem:[%s335 + $0x70] sm:$0xff]
        %v404 = vld [vmem:[%s335 + $0x78] sm:$0xff]
        %v405 = vld [vmem:[%s335 + $0x80] sm:$0xff]
        %v406 = vld [vmem:[%s335 + $0x88] sm:$0xff]
        %v407 = vld [vmem:[%s335 + $0x90] sm:$0xff]
        %v408 = vld [vmem:[%s335 + $0x98] sm:$0xff]
        %v409 = vld [vmem:[%s335 + $0xa0] sm:$0xff]
        %v410 = vld [vmem:[%s335 + $0xa8] sm:$0xff]
        %v411 = vld [vmem:[%s335 + $0xb0] sm:$0xff]
        %v412 = vld [vmem:[%s335 + $0xb8] sm:$0xff]
        %v413 = vld [vmem:[%s335 + $0xc0] sm:$0xff]
        %v414 = vld [vmem:[%s335 + $0xc8] sm:$0xff]
        %v415 = vld [vmem:[%s335 + $0xd0] sm:$0xff]
        %v416 = vld [vmem:[%s335 + $0xd8] sm:$0xff]
        %v417 = vld [vmem:[%s335 + $0xe0] sm:$0xff]
        %v418 = vld [vmem:[%s335 + $0xe8] sm:$0xff]
        %v419 = vld [vmem:[%s335 + $0xf0] sm:$0xff]
        %v420 = vld [vmem:[%s335 + $0xf8] sm:$0xff]
        %v421 = vld [vmem:[%s335 + $0x100] sm:$0xff]
        %v422 = vld [vmem:[%s335 + $0x108] sm:$0xff]
        %v423 = vld [vmem:[%s335 + $0x110] sm:$0xff]
        %v424 = vld [vmem:[%s335 + $0x118] sm:$0xff]
        %v425 = vld [vmem:[%s335 + $0x120] sm:$0xff]
        %v426 = vld [vmem:[%s335 + $0x128] sm:$0xff]
        %v427 = vld [vmem:[%s335 + $0x130] sm:$0xff]
        %v428 = vld [vmem:[%s335 + $0x138] sm:$0xff]
        %v429 = vld [vmem:[%s335 + $0x140] sm:$0xff]
        %v430 = vld [vmem:[%s335 + $0x148] sm:$0xff]
        %v431 = vld [vmem:[%s335 + $0x150] sm:$0xff]
        %v432 = vld [vmem:[%s335 + $0x158] sm:$0xff]
        %v433 = vld [vmem:[%s335 + $0x160] sm:$0xff]
        %v434 = vld [vmem:[%s335 + $0x168] sm:$0xff]
        %v435 = vld [vmem:[%s335 + $0x170] sm:$0xff]
        %v436 = vld [vmem:[%s335 + $0x178] sm:$0xff]
        %v437 = vld [vmem:[%s335 + $0x180] sm:$0xff]
        %v438 = vld [vmem:[%s335 + $0x188] sm:$0xff]
        %v439 = vld [vmem:[%s335 + $0x190] sm:$0xff]
        %v440 = vld [vmem:[%s335 + $0x198] sm:$0xff]
        %v441 = vld [vmem:[%s335 + $0x1a0] sm:$0xff]
        %v442 = vld [vmem:[%s335 + $0x1a8] sm:$0xff]
        %v443 = vld [vmem:[%s335 + $0x1b0] sm:$0xff]
        %v444 = vld [vmem:[%s335 + $0x1b8] sm:$0xff]
        %v445 = vld [vmem:[%s335 + $0x1c0] sm:$0xff]
        %v446 = vld [vmem:[%s335 + $0x1c8] sm:$0xff]
        %v447 = vld [vmem:[%s335 + $0x1d0] sm:$0xff]
        %v448 = vld [vmem:[%s335 + $0x1d8] sm:$0xff]
        %v449 = vld [vmem:[%s335 + $0x1e0] sm:$0xff]
        %v450 = vld [vmem:[%s335 + $0x1e8] sm:$0xff]
        %v451 = vld [vmem:[%s335 + $0x1f0] sm:$0xff]
        %v452 = vld [vmem:[%s335 + $0x1f8] sm:$0xff]
        %v453 = vpack.c.bf16 %v391, %v389
        %v454 = vpack.c.bf16 %v392, %v390
        %v455 = vpack.c.bf16 %v395, %v393
        %v456 = vpack.c.bf16 %v396, %v394
        %v457 = vpack.c.bf16 %v399, %v397
        %v458 = vpack.c.bf16 %v400, %v398
        %v459 = vpack.c.bf16 %v403, %v401
        %v460 = vpack.c.bf16 %v404, %v402
        %v461 = vpack.c.bf16 %v407, %v405
        %v462 = vpack.c.bf16 %v408, %v406
        %v463 = vpack.c.bf16 %v411, %v409
        %v464 = vpack.c.bf16 %v412, %v410
        %v465 = vpack.c.bf16 %v415, %v413
        %v466 = vpack.c.bf16 %v416, %v414
        %v467 = vpack.c.bf16 %v419, %v417
        %v468 = vpack.c.bf16 %v420, %v418
        %v469 = vpack.c.bf16 %v423, %v421
        %v470 = vpack.c.bf16 %v424, %v422
        %v471 = vpack.c.bf16 %v427, %v425
        %v472 = vpack.c.bf16 %v428, %v426
        %v473 = vpack.c.bf16 %v431, %v429
        %v474 = vpack.c.bf16 %v432, %v430
        %v475 = vpack.c.bf16 %v435, %v433
        %v476 = vpack.c.bf16 %v436, %v434
        %v477 = vpack.c.bf16 %v439, %v437
        %v478 = vpack.c.bf16 %v440, %v438
        %v479 = vpack.c.bf16 %v443, %v441
        %v480 = vpack.c.bf16 %v444, %v442
        %v481 = vpack.c.bf16 %v447, %v445
        %v482 = vpack.c.bf16 %v448, %v446
        %v483 = vpack.c.bf16 %v451, %v449
        %v484 = vpack.c.bf16 %v452, %v450
        %v485 = vld [vmem:[%s2] sm:$0xff]
        %v486 = vld [vmem:[%s2 + $0x8] sm:$0xff]
        %v487 = vld [vmem:[%s2 + $0x10] sm:$0xff]
        %v488 = vld [vmem:[%s2 + $0x18] sm:$0xff]
        %v489 = vld [vmem:[%s2 + $0x20] sm:$0xff]
        %v490 = vld [vmem:[%s2 + $0x28] sm:$0xff]
        %v491 = vld [vmem:[%s2 + $0x30] sm:$0xff]
        %v492 = vld [vmem:[%s2 + $0x38] sm:$0xff]
        %v493 = vld [vmem:[%s2 + $0x40] sm:$0xff]
        %v494 = vld [vmem:[%s2 + $0x48] sm:$0xff]
        %v495 = vld [vmem:[%s2 + $0x50] sm:$0xff]
        %v496 = vld [vmem:[%s2 + $0x58] sm:$0xff]
        %v497 = vld [vmem:[%s2 + $0x60] sm:$0xff]
        %v498 = vld [vmem:[%s2 + $0x68] sm:$0xff]
        %v499 = vld [vmem:[%s2 + $0x70] sm:$0xff]
        %v500 = vld [vmem:[%s2 + $0x78] sm:$0xff]
        %v501 = vld [vmem:[%s2 + $0x80] sm:$0xff]
        %v502 = vld [vmem:[%s2 + $0x88] sm:$0xff]
        %v503 = vld [vmem:[%s2 + $0x90] sm:$0xff]
        %v504 = vld [vmem:[%s2 + $0x98] sm:$0xff]
        %v505 = vld [vmem:[%s2 + $0xa0] sm:$0xff]
        %v506 = vld [vmem:[%s2 + $0xa8] sm:$0xff]
        %v507 = vld [vmem:[%s2 + $0xb0] sm:$0xff]
        %v508 = vld [vmem:[%s2 + $0xb8] sm:$0xff]
        %v509 = vld [vmem:[%s2 + $0xc0] sm:$0xff]
        %v510 = vld [vmem:[%s2 + $0xc8] sm:$0xff]
        %v511 = vld [vmem:[%s2 + $0xd0] sm:$0xff]
        %v512 = vld [vmem:[%s2 + $0xd8] sm:$0xff]
        %v513 = vld [vmem:[%s2 + $0xe0] sm:$0xff]
        %v514 = vld [vmem:[%s2 + $0xe8] sm:$0xff]
        %v515 = vld [vmem:[%s2 + $0xf0] sm:$0xff]
        %v516 = vld [vmem:[%s2 + $0xf8] sm:$0xff]
        %v517 = vld [vmem:[%s3] sm:$0x3]
        %v519 = vperm.slane %v517, 0
        %v520 = vperm.slane %v517, 1
        %v555 = vunpack.c.l.b16 %v485
        %v556 = vunpack.c.h.b16 %v485
        %v557 = vunpack.c.l.b16 %v486
        %v558 = vunpack.c.h.b16 %v486
        %v559 = vunpack.c.l.b16 %v487
        %v560 = vunpack.c.h.b16 %v487
        %v561 = vunpack.c.l.b16 %v488
        %v562 = vunpack.c.h.b16 %v488
        %v563 = vunpack.c.l.b16 %v489
        %v564 = vunpack.c.h.b16 %v489
        %v565 = vunpack.c.l.b16 %v490
        %v566 = vunpack.c.h.b16 %v490
        %v567 = vunpack.c.l.b16 %v491
        %v568 = vunpack.c.h.b16 %v491
        %v569 = vunpack.c.l.b16 %v492
        %v570 = vunpack.c.h.b16 %v492
        %v571 = vunpack.c.l.b16 %v493
        %v572 = vunpack.c.h.b16 %v493
        %v573 = vunpack.c.l.b16 %v494
        %v574 = vunpack.c.h.b16 %v494
        %v575 = vunpack.c.l.b16 %v495
        %v576 = vunpack.c.h.b16 %v495
        %v577 = vunpack.c.l.b16 %v496
        %v578 = vunpack.c.h.b16 %v496
        %v579 = vunpack.c.l.b16 %v497
        %v580 = vunpack.c.h.b16 %v497
        %v581 = vunpack.c.l.b16 %v498
        %v582 = vunpack.c.h.b16 %v498
        %v583 = vunpack.c.l.b16 %v499
        %v584 = vunpack.c.h.b16 %v499
        %v585 = vunpack.c.l.b16 %v500
        %v586 = vunpack.c.h.b16 %v500
        %v587 = vunpack.c.l.b16 %v501
        %v588 = vunpack.c.h.b16 %v501
        %v589 = vunpack.c.l.b16 %v502
        %v590 = vunpack.c.h.b16 %v502
        %v591 = vunpack.c.l.b16 %v503
        %v592 = vunpack.c.h.b16 %v503
        %v593 = vunpack.c.l.b16 %v504
        %v594 = vunpack.c.h.b16 %v504
        %v595 = vunpack.c.l.b16 %v505
        %v596 = vunpack.c.h.b16 %v505
        %v597 = vunpack.c.l.b16 %v506
        %v598 = vunpack.c.h.b16 %v506
        %v599 = vunpack.c.l.b16 %v507
        %v600 = vunpack.c.h.b16 %v507
        %v601 = vunpack.c.l.b16 %v508
        %v602 = vunpack.c.h.b16 %v508
        %v603 = vunpack.c.l.b16 %v509
        %v604 = vunpack.c.h.b16 %v509
        %v605 = vunpack.c.l.b16 %v510
        %v606 = vunpack.c.h.b16 %v510
        %v607 = vunpack.c.l.b16 %v511
        %v608 = vunpack.c.h.b16 %v511
        %v609 = vunpack.c.l.b16 %v512
        %v610 = vunpack.c.h.b16 %v512
        %v611 = vunpack.c.l.b16 %v513
        %v612 = vunpack.c.h.b16 %v513
        %v613 = vunpack.c.l.b16 %v514
        %v614 = vunpack.c.h.b16 %v514
        %v615 = vunpack.c.l.b16 %v515
        %v616 = vunpack.c.h.b16 %v515
        %v617 = vunpack.c.l.b16 %v516
        %v618 = vunpack.c.h.b16 %v516
        %v619 = vpack.c.b16 %v557, %v555
        %v620 = vpack.c.b16 %v558, %v556
        %v621 = vpack.c.b16 %v561, %v559
        %v622 = vpack.c.b16 %v562, %v560
        %v623 = vpack.c.b16 %v565, %v563
        %v624 = vpack.c.b16 %v566, %v564
        %v625 = vpack.c.b16 %v569, %v567
        %v626 = vpack.c.b16 %v570, %v568
        %v627 = vpack.c.b16 %v573, %v571
        %v628 = vpack.c.b16 %v574, %v572
        %v629 = vpack.c.b16 %v577, %v575
        %v630 = vpack.c.b16 %v578, %v576
        %v631 = vpack.c.b16 %v581, %v579
        %v632 = vpack.c.b16 %v582, %v580
        %v633 = vpack.c.b16 %v585, %v583
        %v634 = vpack.c.b16 %v586, %v584
        %v635 = vpack.c.b16 %v589, %v587
        %v636 = vpack.c.b16 %v590, %v588
        %v637 = vpack.c.b16 %v593, %v591
        %v638 = vpack.c.b16 %v594, %v592
        %v639 = vpack.c.b16 %v597, %v595
        %v640 = vpack.c.b16 %v598, %v596
        %v641 = vpack.c.b16 %v601, %v599
        %v642 = vpack.c.b16 %v602, %v600
        %v643 = vpack.c.b16 %v605, %v603
        %v644 = vpack.c.b16 %v606, %v604
        %v645 = vpack.c.b16 %v609, %v607
        %v646 = vpack.c.b16 %v610, %v608
        %v647 = vpack.c.b16 %v613, %v611
        %v648 = vpack.c.b16 %v614, %v612
        %v649 = vpack.c.b16 %v617, %v615
        %v650 = vpack.c.b16 %v618, %v616
        %683 = vmatpush.bf16.msra.mxu0 %v633
        %684 = vmatpush.bf16.msra.mxu0 %v631
        %685 = vmatpush.bf16.msra.mxu0 %v629
        %686 = vmatpush.bf16.msra.mxu0 %v627
        %687 = vmatpush.bf16.msra.mxu0 %v625
        %688 = vmatpush.bf16.msra.mxu0 %v623
        %689 = vmatpush.bf16.msra.mxu0 %v621
        %690 = vmatpush.bf16.msra.mxu0 %v619
        %691 = vmatmul.bf16.gmra.mxu0 %v453
        %v692 = vpop.f32.mrf.mxu0
        %v693 = vadd.f32 %v519, %v692
        %v694 = vpop.f32.mrf.mxu0
        %v695 = vadd.f32 %v519, %v694
        %696 = vmatmul.bf16.gmra.mxu0 %v455
        %v697 = vpop.f32.mrf.mxu0
        %v698 = vadd.f32 %v519, %v697
        %v699 = vpop.f32.mrf.mxu0
        %v700 = vadd.f32 %v519, %v699
        %701 = vmatmul.bf16.gmra.mxu0 %v457
        %v702 = vpop.f32.mrf.mxu0
        %v703 = vadd.f32 %v519, %v702
        %v704 = vpop.f32.mrf.mxu0
        %v705 = vadd.f32 %v519, %v704
        %706 = vmatmul.bf16.gmra.mxu0 %v459
        %v707 = vpop.f32.mrf.mxu0
        %v708 = vadd.f32 %v519, %v707
        %v709 = vpop.f32.mrf.mxu0
        %v710 = vadd.f32 %v519, %v709
        %711 = vmatmul.bf16.gmra.mxu0 %v461
        %v712 = vpop.f32.mrf.mxu0
        %v713 = vadd.f32 %v519, %v712
        %v714 = vpop.f32.mrf.mxu0
        %v715 = vadd.f32 %v519, %v714
        %716 = vmatmul.bf16.gmra.mxu0 %v463
        %v717 = vpop.f32.mrf.mxu0
        %v718 = vadd.f32 %v519, %v717
        %v719 = vpop.f32.mrf.mxu0
        %v720 = vadd.f32 %v519, %v719
        %721 = vmatmul.bf16.gmra.mxu0 %v465
        %v722 = vpop.f32.mrf.mxu0
        %v723 = vadd.f32 %v519, %v722
        %v724 = vpop.f32.mrf.mxu0
        %v725 = vadd.f32 %v519, %v724
        %726 = vmatmul.bf16.gmra.mxu0 %v467
        %v727 = vpop.f32.mrf.mxu0
        %v728 = vadd.f32 %v519, %v727
        %v729 = vpop.f32.mrf.mxu0
        %v730 = vadd.f32 %v519, %v729
        %731 = vmatmul.bf16.gmra.mxu0 %v469
        %v732 = vpop.f32.mrf.mxu0
        %v733 = vadd.f32 %v519, %v732
        %v734 = vpop.f32.mrf.mxu0
        %v735 = vadd.f32 %v519, %v734
        %736 = vmatmul.bf16.gmra.mxu0 %v471
        %v737 = vpop.f32.mrf.mxu0
        %v738 = vadd.f32 %v519, %v737
        %v739 = vpop.f32.mrf.mxu0
        %v740 = vadd.f32 %v519, %v739
        %741 = vmatmul.bf16.gmra.mxu0 %v473
        %v742 = vpop.f32.mrf.mxu0
        %v743 = vadd.f32 %v519, %v742
        %v744 = vpop.f32.mrf.mxu0
        %v745 = vadd.f32 %v519, %v744
        %746 = vmatmul.bf16.gmra.mxu0 %v475
        %v747 = vpop.f32.mrf.mxu0
        %v748 = vadd.f32 %v519, %v747
        %v749 = vpop.f32.mrf.mxu0
        %v750 = vadd.f32 %v519, %v749
        %751 = vmatmul.bf16.gmra.mxu0 %v477
        %v752 = vpop.f32.mrf.mxu0
        %v753 = vadd.f32 %v519, %v752
        %v754 = vpop.f32.mrf.mxu0
        %v755 = vadd.f32 %v519, %v754
        %756 = vmatmul.bf16.gmra.mxu0 %v479
        %v757 = vpop.f32.mrf.mxu0
        %v758 = vadd.f32 %v519, %v757
        %v759 = vpop.f32.mrf.mxu0
        %v760 = vadd.f32 %v519, %v759
        %761 = vmatmul.bf16.gmra.mxu0 %v481
        %v762 = vpop.f32.mrf.mxu0
        %v763 = vadd.f32 %v519, %v762
        %v764 = vpop.f32.mrf.mxu0
        %v765 = vadd.f32 %v519, %v764
        %766 = vmatmul.bf16.gmra.mxu0 %v483
        %v767 = vpop.f32.mrf.mxu0
        %v768 = vadd.f32 %v519, %v767
        %v769 = vpop.f32.mrf.mxu0
        %v770 = vadd.f32 %v519, %v769
        %771 = vdwg.mxu0
        %772 = vmatpush.bf16.msra.mxu0 %v649
        %773 = vmatpush.bf16.msra.mxu0 %v647
        %774 = vmatpush.bf16.msra.mxu0 %v645
        %775 = vmatpush.bf16.msra.mxu0 %v643
        %776 = vmatpush.bf16.msra.mxu0 %v641
        %777 = vmatpush.bf16.msra.mxu0 %v639
        %778 = vmatpush.bf16.msra.mxu0 %v637
        %779 = vmatpush.bf16.msra.mxu0 %v635
        %780 = vmatmul.bf16.gmra.mxu0 %v454
        %v781 = vpop.f32.mrf.mxu0
        %v782 = vadd.f32 %v693, %v781
        %v783 = vpop.f32.mrf.mxu0
        %v784 = vadd.f32 %v695, %v783
        %785 = vmatmul.bf16.gmra.mxu0 %v456
        %v786 = vpop.f32.mrf.mxu0
        %v787 = vadd.f32 %v698, %v786
        %v788 = vpop.f32.mrf.mxu0
        %v789 = vadd.f32 %v700, %v788
        %790 = vmatmul.bf16.gmra.mxu0 %v458
        %v791 = vpop.f32.mrf.mxu0
        %v792 = vadd.f32 %v703, %v791
        %v793 = vpop.f32.mrf.mxu0
        %v794 = vadd.f32 %v705, %v793
        %795 = vmatmul.bf16.gmra.mxu0 %v460
        %v796 = vpop.f32.mrf.mxu0
        %v797 = vadd.f32 %v708, %v796
        %v798 = vpop.f32.mrf.mxu0
        %v799 = vadd.f32 %v710, %v798
        %800 = vmatmul.bf16.gmra.mxu0 %v462
        %v801 = vpop.f32.mrf.mxu0
        %v802 = vadd.f32 %v713, %v801
        %v803 = vpop.f32.mrf.mxu0
        %v804 = vadd.f32 %v715, %v803
        %805 = vmatmul.bf16.gmra.mxu0 %v464
        %v806 = vpop.f32.mrf.mxu0
        %v807 = vadd.f32 %v718, %v806
        %v808 = vpop.f32.mrf.mxu0
        %v809 = vadd.f32 %v720, %v808
        %810 = vmatmul.bf16.gmra.mxu0 %v466
        %v811 = vpop.f32.mrf.mxu0
        %v812 = vadd.f32 %v723, %v811
        %v813 = vpop.f32.mrf.mxu0
        %v814 = vadd.f32 %v725, %v813
        %815 = vmatmul.bf16.gmra.mxu0 %v468
        %v816 = vpop.f32.mrf.mxu0
        %v817 = vadd.f32 %v728, %v816
        %v818 = vpop.f32.mrf.mxu0
        %v819 = vadd.f32 %v730, %v818
        %820 = vmatmul.bf16.gmra.mxu0 %v470
        %v821 = vpop.f32.mrf.mxu0
        %v822 = vadd.f32 %v733, %v821
        %v823 = vpop.f32.mrf.mxu0
        %v824 = vadd.f32 %v735, %v823
        %825 = vmatmul.bf16.gmra.mxu0 %v472
        %v826 = vpop.f32.mrf.mxu0
        %v827 = vadd.f32 %v738, %v826
        %v828 = vpop.f32.mrf.mxu0
        %v829 = vadd.f32 %v740, %v828
        %830 = vmatmul.bf16.gmra.mxu0 %v474
        %v831 = vpop.f32.mrf.mxu0
        %v832 = vadd.f32 %v743, %v831
        %v833 = vpop.f32.mrf.mxu0
        %v834 = vadd.f32 %v745, %v833
        %835 = vmatmul.bf16.gmra.mxu0 %v476
        %v836 = vpop.f32.mrf.mxu0
        %v837 = vadd.f32 %v748, %v836
        %v838 = vpop.f32.mrf.mxu0
        %v839 = vadd.f32 %v750, %v838
        %840 = vmatmul.bf16.gmra.mxu0 %v478
        %v841 = vpop.f32.mrf.mxu0
        %v842 = vadd.f32 %v753, %v841
        %v843 = vpop.f32.mrf.mxu0
        %v844 = vadd.f32 %v755, %v843
        %845 = vmatmul.bf16.gmra.mxu0 %v480
        %v846 = vpop.f32.mrf.mxu0
        %v847 = vadd.f32 %v758, %v846
        %v848 = vpop.f32.mrf.mxu0
        %v849 = vadd.f32 %v760, %v848
        %850 = vmatmul.bf16.gmra.mxu0 %v482
        %v851 = vpop.f32.mrf.mxu0
        %v852 = vadd.f32 %v763, %v851
        %v853 = vpop.f32.mrf.mxu0
        %v854 = vadd.f32 %v765, %v853
        %855 = vmatmul.bf16.gmra.mxu0 %v484
        %v856 = vpop.f32.mrf.mxu0
        %v857 = vadd.f32 %v768, %v856
        %v858 = vpop.f32.mrf.mxu0
        %v859 = vadd.f32 %v770, %v858
        %860 = vdwg.mxu0
        %861 = vmatpush.bf16.msra.mxu0 %v634
        %862 = vmatpush.bf16.msra.mxu0 %v632
        %863 = vmatpush.bf16.msra.mxu0 %v630
        %864 = vmatpush.bf16.msra.mxu0 %v628
        %865 = vmatpush.bf16.msra.mxu0 %v626
        %866 = vmatpush.bf16.msra.mxu0 %v624
        %867 = vmatpush.bf16.msra.mxu0 %v622
        %868 = vmatpush.bf16.msra.mxu0 %v620
        %869 = vmatmul.bf16.gmra.mxu0 %v453
        %v870 = vpop.f32.mrf.mxu0
        %v871 = vadd.f32 %v520, %v870
        %v872 = vpop.f32.mrf.mxu0
        %v873 = vadd.f32 %v520, %v872
        %874 = vmatmul.bf16.gmra.mxu0 %v455
        %v875 = vpop.f32.mrf.mxu0
        %v876 = vadd.f32 %v520, %v875
        %v877 = vpop.f32.mrf.mxu0
        %v878 = vadd.f32 %v520, %v877
        %879 = vmatmul.bf16.gmra.mxu0 %v457
        %v880 = vpop.f32.mrf.mxu0
        %v881 = vadd.f32 %v520, %v880
        %v882 = vpop.f32.mrf.mxu0
        %v883 = vadd.f32 %v520, %v882
        %884 = vmatmul.bf16.gmra.mxu0 %v459
        %v885 = vpop.f32.mrf.mxu0
        %v886 = vadd.f32 %v520, %v885
        %v887 = vpop.f32.mrf.mxu0
        %v888 = vadd.f32 %v520, %v887
        %889 = vmatmul.bf16.gmra.mxu0 %v461
        %v890 = vpop.f32.mrf.mxu0
        %v891 = vadd.f32 %v520, %v890
        %v892 = vpop.f32.mrf.mxu0
        %v893 = vadd.f32 %v520, %v892
        %894 = vmatmul.bf16.gmra.mxu0 %v463
        %v895 = vpop.f32.mrf.mxu0
        %v896 = vadd.f32 %v520, %v895
        %v897 = vpop.f32.mrf.mxu0
        %v898 = vadd.f32 %v520, %v897
        %899 = vmatmul.bf16.gmra.mxu0 %v465
        %v900 = vpop.f32.mrf.mxu0
        %v901 = vadd.f32 %v520, %v900
        %v902 = vpop.f32.mrf.mxu0
        %v903 = vadd.f32 %v520, %v902
        %904 = vmatmul.bf16.gmra.mxu0 %v467
        %v905 = vpop.f32.mrf.mxu0
        %v906 = vadd.f32 %v520, %v905
        %v907 = vpop.f32.mrf.mxu0
        %v908 = vadd.f32 %v520, %v907
        %909 = vmatmul.bf16.gmra.mxu0 %v469
        %v910 = vpop.f32.mrf.mxu0
        %v911 = vadd.f32 %v520, %v910
        %v912 = vpop.f32.mrf.mxu0
        %v913 = vadd.f32 %v520, %v912
        %914 = vmatmul.bf16.gmra.mxu0 %v471
        %v915 = vpop.f32.mrf.mxu0
        %v916 = vadd.f32 %v520, %v915
        %v917 = vpop.f32.mrf.mxu0
        %v918 = vadd.f32 %v520, %v917
        %919 = vmatmul.bf16.gmra.mxu0 %v473
        %v920 = vpop.f32.mrf.mxu0
        %v921 = vadd.f32 %v520, %v920
        %v922 = vpop.f32.mrf.mxu0
        %v923 = vadd.f32 %v520, %v922
        %924 = vmatmul.bf16.gmra.mxu0 %v475
        %v925 = vpop.f32.mrf.mxu0
        %v926 = vadd.f32 %v520, %v925
        %v927 = vpop.f32.mrf.mxu0
        %v928 = vadd.f32 %v520, %v927
        %929 = vmatmul.bf16.gmra.mxu0 %v477
        %v930 = vpop.f32.mrf.mxu0
        %v931 = vadd.f32 %v520, %v930
        %v932 = vpop.f32.mrf.mxu0
        %v933 = vadd.f32 %v520, %v932
        %934 = vmatmul.bf16.gmra.mxu0 %v479
        %v935 = vpop.f32.mrf.mxu0
        %v936 = vadd.f32 %v520, %v935
        %v937 = vpop.f32.mrf.mxu0
        %v938 = vadd.f32 %v520, %v937
        %939 = vmatmul.bf16.gmra.mxu0 %v481
        %v940 = vpop.f32.mrf.mxu0
        %v941 = vadd.f32 %v520, %v940
        %v942 = vpop.f32.mrf.mxu0
        %v943 = vadd.f32 %v520, %v942
        %944 = vmatmul.bf16.gmra.mxu0 %v483
        %v945 = vpop.f32.mrf.mxu0
        %v946 = vadd.f32 %v520, %v945
        %v947 = vpop.f32.mrf.mxu0
        %v948 = vadd.f32 %v520, %v947
        %949 = vdwg.mxu0
        %950 = vmatpush.bf16.msra.mxu0 %v650
        %951 = vmatpush.bf16.msra.mxu0 %v648
        %952 = vmatpush.bf16.msra.mxu0 %v646
        %953 = vmatpush.bf16.msra.mxu0 %v644
        %954 = vmatpush.bf16.msra.mxu0 %v642
        %955 = vmatpush.bf16.msra.mxu0 %v640
        %956 = vmatpush.bf16.msra.mxu0 %v638
        %957 = vmatpush.bf16.msra.mxu0 %v636
        %958 = vmatmul.bf16.gmra.mxu0 %v454
        %v959 = vpop.f32.mrf.mxu0
        %v960 = vadd.f32 %v871, %v959
        %v961 = vpop.f32.mrf.mxu0
        %v962 = vadd.f32 %v873, %v961
        %963 = vmatmul.bf16.gmra.mxu0 %v456
        %v964 = vpop.f32.mrf.mxu0
        %v965 = vadd.f32 %v876, %v964
        %v966 = vpop.f32.mrf.mxu0
        %v967 = vadd.f32 %v878, %v966
        %968 = vmatmul.bf16.gmra.mxu0 %v458
        %v969 = vpop.f32.mrf.mxu0
        %v970 = vadd.f32 %v881, %v969
        %v971 = vpop.f32.mrf.mxu0
        %v972 = vadd.f32 %v883, %v971
        %973 = vmatmul.bf16.gmra.mxu0 %v460
        %v974 = vpop.f32.mrf.mxu0
        %v975 = vadd.f32 %v886, %v974
        %v976 = vpop.f32.mrf.mxu0
        %v977 = vadd.f32 %v888, %v976
        %978 = vmatmul.bf16.gmra.mxu0 %v462
        %v979 = vpop.f32.mrf.mxu0
        %v980 = vadd.f32 %v891, %v979
        %v981 = vpop.f32.mrf.mxu0
        %v982 = vadd.f32 %v893, %v981
        %983 = vmatmul.bf16.gmra.mxu0 %v464
        %v984 = vpop.f32.mrf.mxu0
        %v985 = vadd.f32 %v896, %v984
        %v986 = vpop.f32.mrf.mxu0
        %v987 = vadd.f32 %v898, %v986
        %988 = vmatmul.bf16.gmra.mxu0 %v466
        %v989 = vpop.f32.mrf.mxu0
        %v990 = vadd.f32 %v901, %v989
        %v991 = vpop.f32.mrf.mxu0
        %v992 = vadd.f32 %v903, %v991
        %993 = vmatmul.bf16.gmra.mxu0 %v468
        %v994 = vpop.f32.mrf.mxu0
        %v995 = vadd.f32 %v906, %v994
        %v996 = vpop.f32.mrf.mxu0
        %v997 = vadd.f32 %v908, %v996
        %998 = vmatmul.bf16.gmra.mxu0 %v470
        %v999 = vpop.f32.mrf.mxu0
        %v1000 = vadd.f32 %v911, %v999
        %v1001 = vpop.f32.mrf.mxu0
        %v1002 = vadd.f32 %v913, %v1001
        %1003 = vmatmul.bf16.gmra.mxu0 %v472
        %v1004 = vpop.f32.mrf.mxu0
        %v1005 = vadd.f32 %v916, %v1004
        %v1006 = vpop.f32.mrf.mxu0
        %v1007 = vadd.f32 %v918, %v1006
        %1008 = vmatmul.bf16.gmra.mxu0 %v474
        %v1009 = vpop.f32.mrf.mxu0
        %v1010 = vadd.f32 %v921, %v1009
        %v1011 = vpop.f32.mrf.mxu0
        %v1012 = vadd.f32 %v923, %v1011
        %1013 = vmatmul.bf16.gmra.mxu0 %v476
        %v1014 = vpop.f32.mrf.mxu0
        %v1015 = vadd.f32 %v926, %v1014
        %v1016 = vpop.f32.mrf.mxu0
        %v1017 = vadd.f32 %v928, %v1016
        %1018 = vmatmul.bf16.gmra.mxu0 %v478
        %v1019 = vpop.f32.mrf.mxu0
        %v1020 = vadd.f32 %v931, %v1019
        %v1021 = vpop.f32.mrf.mxu0
        %v1022 = vadd.f32 %v933, %v1021
        %1023 = vmatmul.bf16.gmra.mxu0 %v480
        %v1024 = vpop.f32.mrf.mxu0
        %v1025 = vadd.f32 %v936, %v1024
        %v1026 = vpop.f32.mrf.mxu0
        %v1027 = vadd.f32 %v938, %v1026
        %1028 = vmatmul.bf16.gmra.mxu0 %v482
        %v1029 = vpop.f32.mrf.mxu0
        %v1030 = vadd.f32 %v941, %v1029
        %v1031 = vpop.f32.mrf.mxu0
        %v1032 = vadd.f32 %v943, %v1031
        %1033 = vmatmul.bf16.gmra.mxu0 %v484
        %v1034 = vpop.f32.mrf.mxu0
        %v1035 = vadd.f32 %v946, %v1034
        %v1036 = vpop.f32.mrf.mxu0
        %v1037 = vadd.f32 %v948, %v1036
        %1038 = vdwg.mxu0
        %v1039 = vmax.f32 %v782, 0.0
        %v1040 = vmax.f32 %v960, 0.0
        %v1041 = vmax.f32 %v784, 0.0
        %v1042 = vmax.f32 %v962, 0.0
        %v1043 = vmax.f32 %v787, 0.0
        %v1044 = vmax.f32 %v965, 0.0
        %v1045 = vmax.f32 %v789, 0.0
        %v1046 = vmax.f32 %v967, 0.0
        %v1047 = vmax.f32 %v792, 0.0
        %v1048 = vmax.f32 %v970, 0.0
        %v1049 = vmax.f32 %v794, 0.0
        %v1050 = vmax.f32 %v972, 0.0
        %v1051 = vmax.f32 %v797, 0.0
        %v1052 = vmax.f32 %v975, 0.0
        %v1053 = vmax.f32 %v799, 0.0
        %v1054 = vmax.f32 %v977, 0.0
        %v1055 = vmax.f32 %v802, 0.0
        %v1056 = vmax.f32 %v980, 0.0
        %v1057 = vmax.f32 %v804, 0.0
        %v1058 = vmax.f32 %v982, 0.0
        %v1059 = vmax.f32 %v807, 0.0
        %v1060 = vmax.f32 %v985, 0.0
        %v1061 = vmax.f32 %v809, 0.0
        %v1062 = vmax.f32 %v987, 0.0
        %v1063 = vmax.f32 %v812, 0.0
        %v1064 = vmax.f32 %v990, 0.0
        %v1065 = vmax.f32 %v814, 0.0
        %v1066 = vmax.f32 %v992, 0.0
        %v1067 = vmax.f32 %v817, 0.0
        %v1068 = vmax.f32 %v995, 0.0
        %v1069 = vmax.f32 %v819, 0.0
        %v1070 = vmax.f32 %v997, 0.0
        %v1071 = vmax.f32 %v822, 0.0
        %v1072 = vmax.f32 %v1000, 0.0
        %v1073 = vmax.f32 %v824, 0.0
        %v1074 = vmax.f32 %v1002, 0.0
        %v1075 = vmax.f32 %v827, 0.0
        %v1076 = vmax.f32 %v1005, 0.0
        %v1077 = vmax.f32 %v829, 0.0
        %v1078 = vmax.f32 %v1007, 0.0
        %v1079 = vmax.f32 %v832, 0.0
        %v1080 = vmax.f32 %v1010, 0.0
        %v1081 = vmax.f32 %v834, 0.0
        %v1082 = vmax.f32 %v1012, 0.0
        %v1083 = vmax.f32 %v837, 0.0
        %v1084 = vmax.f32 %v1015, 0.0
        %v1085 = vmax.f32 %v839, 0.0
        %v1086 = vmax.f32 %v1017, 0.0
        %v1087 = vmax.f32 %v842, 0.0
        %v1088 = vmax.f32 %v1020, 0.0
        %v1089 = vmax.f32 %v844, 0.0
        %v1090 = vmax.f32 %v1022, 0.0
        %v1091 = vmax.f32 %v847, 0.0
        %v1092 = vmax.f32 %v1025, 0.0
        %v1093 = vmax.f32 %v849, 0.0
        %v1094 = vmax.f32 %v1027, 0.0
        %v1095 = vmax.f32 %v852, 0.0
        %v1096 = vmax.f32 %v1030, 0.0
        %v1097 = vmax.f32 %v854, 0.0
        %v1098 = vmax.f32 %v1032, 0.0
        %v1099 = vmax.f32 %v857, 0.0
        %v1100 = vmax.f32 %v1035, 0.0
        %v1101 = vmax.f32 %v859, 0.0
        %v1102 = vmax.f32 %v1037, 0.0
        %v1103 = vpack.c.bf16 %v1041, %v1039
        %v1104 = vpack.c.bf16 %v1042, %v1040
        %v1105 = vpack.c.bf16 %v1045, %v1043
        %v1106 = vpack.c.bf16 %v1046, %v1044
        %v1107 = vpack.c.bf16 %v1049, %v1047
        %v1108 = vpack.c.bf16 %v1050, %v1048
        %v1109 = vpack.c.bf16 %v1053, %v1051
        %v1110 = vpack.c.bf16 %v1054, %v1052
        %v1111 = vpack.c.bf16 %v1057, %v1055
        %v1112 = vpack.c.bf16 %v1058, %v1056
        %v1113 = vpack.c.bf16 %v1061, %v1059
        %v1114 = vpack.c.bf16 %v1062, %v1060
        %v1115 = vpack.c.bf16 %v1065, %v1063
        %v1116 = vpack.c.bf16 %v1066, %v1064
        %v1117 = vpack.c.bf16 %v1069, %v1067
        %v1118 = vpack.c.bf16 %v1070, %v1068
        %v1119 = vpack.c.bf16 %v1073, %v1071
        %v1120 = vpack.c.bf16 %v1074, %v1072
        %v1121 = vpack.c.bf16 %v1077, %v1075
        %v1122 = vpack.c.bf16 %v1078, %v1076
        %v1123 = vpack.c.bf16 %v1081, %v1079
        %v1124 = vpack.c.bf16 %v1082, %v1080
        %v1125 = vpack.c.bf16 %v1085, %v1083
        %v1126 = vpack.c.bf16 %v1086, %v1084
        %v1127 = vpack.c.bf16 %v1089, %v1087
        %v1128 = vpack.c.bf16 %v1090, %v1088
        %v1129 = vpack.c.bf16 %v1093, %v1091
        %v1130 = vpack.c.bf16 %v1094, %v1092
        %v1131 = vpack.c.bf16 %v1097, %v1095
        %v1132 = vpack.c.bf16 %v1098, %v1096
        %v1133 = vpack.c.bf16 %v1101, %v1099
        %v1134 = vpack.c.bf16 %v1102, %v1100
        %v1135 = vld [vmem:[%s4] sm:$0xf]
        %v1136 = vld [vmem:[%s4 + $0x4] sm:$0xf]
        %v1137 = vld [vmem:[%s4 + $0x8] sm:$0xf]
        %v1138 = vld [vmem:[%s4 + $0xc] sm:$0xf]
        %v1139 = vld [vmem:[%s4 + $0x10] sm:$0xf]
        %v1140 = vld [vmem:[%s4 + $0x14] sm:$0xf]
        %v1141 = vld [vmem:[%s4 + $0x18] sm:$0xf]
        %v1142 = vld [vmem:[%s4 + $0x1c] sm:$0xf]
        %v1143 = vld [vmem:[%s4 + $0x20] sm:$0xf]
        %v1144 = vld [vmem:[%s4 + $0x24] sm:$0xf]
        %v1145 = vld [vmem:[%s4 + $0x28] sm:$0xf]
        %v1146 = vld [vmem:[%s4 + $0x2c] sm:$0xf]
        %v1147 = vld [vmem:[%s4 + $0x30] sm:$0xf]
        %v1148 = vld [vmem:[%s4 + $0x34] sm:$0xf]
        %v1149 = vld [vmem:[%s4 + $0x38] sm:$0xf]
        %v1150 = vld [vmem:[%s4 + $0x3c] sm:$0xf]
        %v1151 = vld [vmem:[%s4 + $0x40] sm:$0xf]
        %v1152 = vld [vmem:[%s4 + $0x44] sm:$0xf]
        %v1153 = vld [vmem:[%s4 + $0x48] sm:$0xf]
        %v1154 = vld [vmem:[%s4 + $0x4c] sm:$0xf]
        %v1155 = vld [vmem:[%s4 + $0x50] sm:$0xf]
        %v1156 = vld [vmem:[%s4 + $0x54] sm:$0xf]
        %v1157 = vld [vmem:[%s4 + $0x58] sm:$0xf]
        %v1158 = vld [vmem:[%s4 + $0x5c] sm:$0xf]
        %v1159 = vld [vmem:[%s4 + $0x60] sm:$0xf]
        %v1160 = vld [vmem:[%s4 + $0x64] sm:$0xf]
        %v1161 = vld [vmem:[%s4 + $0x68] sm:$0xf]
        %v1162 = vld [vmem:[%s4 + $0x6c] sm:$0xf]
        %v1163 = vld [vmem:[%s4 + $0x70] sm:$0xf]
        %v1164 = vld [vmem:[%s4 + $0x74] sm:$0xf]
        %v1165 = vld [vmem:[%s4 + $0x78] sm:$0xf]
        %v1166 = vld [vmem:[%s4 + $0x7c] sm:$0xf]
        %v1167 = vld [vmem:[%s5] sm:$0x1]
        %v1169 = vperm.slane %v1167, 0
        %v1203 = vunpack.c.l.b16 %v1135
        %v1204 = vunpack.c.l.b16 %v1136
        %v1205 = vunpack.c.l.b16 %v1137
        %v1206 = vunpack.c.l.b16 %v1138
        %v1207 = vunpack.c.l.b16 %v1139
        %v1208 = vunpack.c.l.b16 %v1140
        %v1209 = vunpack.c.l.b16 %v1141
        %v1210 = vunpack.c.l.b16 %v1142
        %v1211 = vunpack.c.l.b16 %v1143
        %v1212 = vunpack.c.l.b16 %v1144
        %v1213 = vunpack.c.l.b16 %v1145
        %v1214 = vunpack.c.l.b16 %v1146
        %v1215 = vunpack.c.l.b16 %v1147
        %v1216 = vunpack.c.l.b16 %v1148
        %v1217 = vunpack.c.l.b16 %v1149
        %v1218 = vunpack.c.l.b16 %v1150
        %v1219 = vunpack.c.l.b16 %v1151
        %v1220 = vunpack.c.l.b16 %v1152
        %v1221 = vunpack.c.l.b16 %v1153
        %v1222 = vunpack.c.l.b16 %v1154
        %v1223 = vunpack.c.l.b16 %v1155
        %v1224 = vunpack.c.l.b16 %v1156
        %v1225 = vunpack.c.l.b16 %v1157
        %v1226 = vunpack.c.l.b16 %v1158
        %v1227 = vunpack.c.l.b16 %v1159
        %v1228 = vunpack.c.l.b16 %v1160
        %v1229 = vunpack.c.l.b16 %v1161
        %v1230 = vunpack.c.l.b16 %v1162
        %v1231 = vunpack.c.l.b16 %v1163
        %v1232 = vunpack.c.l.b16 %v1164
        %v1233 = vunpack.c.l.b16 %v1165
        %v1234 = vunpack.c.l.b16 %v1166
        %v1235 = vpack.c.b16 %v1204, %v1203
        %v1236 = vpack.c.b16 %v1206, %v1205
        %v1237 = vpack.c.b16 %v1208, %v1207
        %v1238 = vpack.c.b16 %v1210, %v1209
        %v1239 = vpack.c.b16 %v1212, %v1211
        %v1240 = vpack.c.b16 %v1214, %v1213
        %v1241 = vpack.c.b16 %v1216, %v1215
        %v1242 = vpack.c.b16 %v1218, %v1217
        %v1243 = vpack.c.b16 %v1220, %v1219
        %v1244 = vpack.c.b16 %v1222, %v1221
        %v1245 = vpack.c.b16 %v1224, %v1223
        %v1246 = vpack.c.b16 %v1226, %v1225
        %v1247 = vpack.c.b16 %v1228, %v1227
        %v1248 = vpack.c.b16 %v1230, %v1229
        %v1249 = vpack.c.b16 %v1232, %v1231
        %v1250 = vpack.c.b16 %v1234, %v1233
        %1267 = vmatpush.bf16.msra.mxu0 %v1242
        %1268 = vmatpush.bf16.msra.mxu0 %v1241
        %1269 = vmatpush.bf16.msra.mxu0 %v1240
        %1270 = vmatpush.bf16.msra.mxu0 %v1239
        %1271 = vmatpush.bf16.msra.mxu0 %v1238
        %1272 = vmatpush.bf16.msra.mxu0 %v1237
        %1273 = vmatpush.bf16.msra.mxu0 %v1236
        %1274 = vmatpush.bf16.msra.mxu0 %v1235
        %1275 = vmatmul.bf16.gmra.mxu0 %v1103
        %v1276 = vpop.f32.mrf.mxu0
        %v1277 = vadd.f32 %v1169, %v1276
        %v1278 = vpop.f32.mrf.mxu0
        %v1279 = vadd.f32 %v1169, %v1278
        %1280 = vmatmul.bf16.gmra.mxu0 %v1105
        %v1281 = vpop.f32.mrf.mxu0
        %v1282 = vadd.f32 %v1169, %v1281
        %v1283 = vpop.f32.mrf.mxu0
        %v1284 = vadd.f32 %v1169, %v1283
        %1285 = vmatmul.bf16.gmra.mxu0 %v1107
        %v1286 = vpop.f32.mrf.mxu0
        %v1287 = vadd.f32 %v1169, %v1286
        %v1288 = vpop.f32.mrf.mxu0
        %v1289 = vadd.f32 %v1169, %v1288
        %1290 = vmatmul.bf16.gmra.mxu0 %v1109
        %v1291 = vpop.f32.mrf.mxu0
        %v1292 = vadd.f32 %v1169, %v1291
        %v1293 = vpop.f32.mrf.mxu0
        %v1294 = vadd.f32 %v1169, %v1293
        %1295 = vmatmul.bf16.gmra.mxu0 %v1111
        %v1296 = vpop.f32.mrf.mxu0
        %v1297 = vadd.f32 %v1169, %v1296
        %v1298 = vpop.f32.mrf.mxu0
        %v1299 = vadd.f32 %v1169, %v1298
        %1300 = vmatmul.bf16.gmra.mxu0 %v1113
        %v1301 = vpop.f32.mrf.mxu0
        %v1302 = vadd.f32 %v1169, %v1301
        %v1303 = vpop.f32.mrf.mxu0
        %v1304 = vadd.f32 %v1169, %v1303
        %1305 = vmatmul.bf16.gmra.mxu0 %v1115
        %v1306 = vpop.f32.mrf.mxu0
        %v1307 = vadd.f32 %v1169, %v1306
        %v1308 = vpop.f32.mrf.mxu0
        %v1309 = vadd.f32 %v1169, %v1308
        %1310 = vmatmul.bf16.gmra.mxu0 %v1117
        %v1311 = vpop.f32.mrf.mxu0
        %v1312 = vadd.f32 %v1169, %v1311
        %v1313 = vpop.f32.mrf.mxu0
        %v1314 = vadd.f32 %v1169, %v1313
        %1315 = vmatmul.bf16.gmra.mxu0 %v1119
        %v1316 = vpop.f32.mrf.mxu0
        %v1317 = vadd.f32 %v1169, %v1316
        %v1318 = vpop.f32.mrf.mxu0
        %v1319 = vadd.f32 %v1169, %v1318
        %1320 = vmatmul.bf16.gmra.mxu0 %v1121
        %v1321 = vpop.f32.mrf.mxu0
        %v1322 = vadd.f32 %v1169, %v1321
        %v1323 = vpop.f32.mrf.mxu0
        %v1324 = vadd.f32 %v1169, %v1323
        %1325 = vmatmul.bf16.gmra.mxu0 %v1123
        %v1326 = vpop.f32.mrf.mxu0
        %v1327 = vadd.f32 %v1169, %v1326
        %v1328 = vpop.f32.mrf.mxu0
        %v1329 = vadd.f32 %v1169, %v1328
        %1330 = vmatmul.bf16.gmra.mxu0 %v1125
        %v1331 = vpop.f32.mrf.mxu0
        %v1332 = vadd.f32 %v1169, %v1331
        %v1333 = vpop.f32.mrf.mxu0
        %v1334 = vadd.f32 %v1169, %v1333
        %1335 = vmatmul.bf16.gmra.mxu0 %v1127
        %v1336 = vpop.f32.mrf.mxu0
        %v1337 = vadd.f32 %v1169, %v1336
        %v1338 = vpop.f32.mrf.mxu0
        %v1339 = vadd.f32 %v1169, %v1338
        %1340 = vmatmul.bf16.gmra.mxu0 %v1129
        %v1341 = vpop.f32.mrf.mxu0
        %v1342 = vadd.f32 %v1169, %v1341
        %v1343 = vpop.f32.mrf.mxu0
        %v1344 = vadd.f32 %v1169, %v1343
        %1345 = vmatmul.bf16.gmra.mxu0 %v1131
        %v1346 = vpop.f32.mrf.mxu0
        %v1347 = vadd.f32 %v1169, %v1346
        %v1348 = vpop.f32.mrf.mxu0
        %v1349 = vadd.f32 %v1169, %v1348
        %1350 = vmatmul.bf16.gmra.mxu0 %v1133
        %v1351 = vpop.f32.mrf.mxu0
        %v1352 = vadd.f32 %v1169, %v1351
        %v1353 = vpop.f32.mrf.mxu0
        %v1354 = vadd.f32 %v1169, %v1353
        %1355 = vdwg.mxu0
        %1356 = vmatpush.bf16.msra.mxu0 %v1250
        %1357 = vmatpush.bf16.msra.mxu0 %v1249
        %1358 = vmatpush.bf16.msra.mxu0 %v1248
        %1359 = vmatpush.bf16.msra.mxu0 %v1247
        %1360 = vmatpush.bf16.msra.mxu0 %v1246
        %1361 = vmatpush.bf16.msra.mxu0 %v1245
        %1362 = vmatpush.bf16.msra.mxu0 %v1244
        %1363 = vmatpush.bf16.msra.mxu0 %v1243
        %1364 = vmatmul.bf16.gmra.mxu0 %v1104
        %v1365 = vpop.f32.mrf.mxu0
        %v1366 = vadd.f32 %v1277, %v1365
        %v1367 = vpop.f32.mrf.mxu0
        %v1368 = vadd.f32 %v1279, %v1367
        %1369 = vmatmul.bf16.gmra.mxu0 %v1106
        %v1370 = vpop.f32.mrf.mxu0
        %v1371 = vadd.f32 %v1282, %v1370
        %v1372 = vpop.f32.mrf.mxu0
        %v1373 = vadd.f32 %v1284, %v1372
        %1374 = vmatmul.bf16.gmra.mxu0 %v1108
        %v1375 = vpop.f32.mrf.mxu0
        %v1376 = vadd.f32 %v1287, %v1375
        %v1377 = vpop.f32.mrf.mxu0
        %v1378 = vadd.f32 %v1289, %v1377
        %1379 = vmatmul.bf16.gmra.mxu0 %v1110
        %v1380 = vpop.f32.mrf.mxu0
        %v1381 = vadd.f32 %v1292, %v1380
        %v1382 = vpop.f32.mrf.mxu0
        %v1383 = vadd.f32 %v1294, %v1382
        %1384 = vmatmul.bf16.gmra.mxu0 %v1112
        %v1385 = vpop.f32.mrf.mxu0
        %v1386 = vadd.f32 %v1297, %v1385
        %v1387 = vpop.f32.mrf.mxu0
        %v1388 = vadd.f32 %v1299, %v1387
        %1389 = vmatmul.bf16.gmra.mxu0 %v1114
        %v1390 = vpop.f32.mrf.mxu0
        %v1391 = vadd.f32 %v1302, %v1390
        %v1392 = vpop.f32.mrf.mxu0
        %v1393 = vadd.f32 %v1304, %v1392
        %1394 = vmatmul.bf16.gmra.mxu0 %v1116
        %v1395 = vpop.f32.mrf.mxu0
        %v1396 = vadd.f32 %v1307, %v1395
        %v1397 = vpop.f32.mrf.mxu0
        %v1398 = vadd.f32 %v1309, %v1397
        %1399 = vmatmul.bf16.gmra.mxu0 %v1118
        %v1400 = vpop.f32.mrf.mxu0
        %v1401 = vadd.f32 %v1312, %v1400
        %v1402 = vpop.f32.mrf.mxu0
        %v1403 = vadd.f32 %v1314, %v1402
        %1404 = vmatmul.bf16.gmra.mxu0 %v1120
        %v1405 = vpop.f32.mrf.mxu0
        %v1406 = vadd.f32 %v1317, %v1405
        %v1407 = vpop.f32.mrf.mxu0
        %v1408 = vadd.f32 %v1319, %v1407
        %1409 = vmatmul.bf16.gmra.mxu0 %v1122
        %v1410 = vpop.f32.mrf.mxu0
        %v1411 = vadd.f32 %v1322, %v1410
        %v1412 = vpop.f32.mrf.mxu0
        %v1413 = vadd.f32 %v1324, %v1412
        %1414 = vmatmul.bf16.gmra.mxu0 %v1124
        %v1415 = vpop.f32.mrf.mxu0
        %v1416 = vadd.f32 %v1327, %v1415
        %v1417 = vpop.f32.mrf.mxu0
        %v1418 = vadd.f32 %v1329, %v1417
        %1419 = vmatmul.bf16.gmra.mxu0 %v1126
        %v1420 = vpop.f32.mrf.mxu0
        %v1421 = vadd.f32 %v1332, %v1420
        %v1422 = vpop.f32.mrf.mxu0
        %v1423 = vadd.f32 %v1334, %v1422
        %1424 = vmatmul.bf16.gmra.mxu0 %v1128
        %v1425 = vpop.f32.mrf.mxu0
        %v1426 = vadd.f32 %v1337, %v1425
        %v1427 = vpop.f32.mrf.mxu0
        %v1428 = vadd.f32 %v1339, %v1427
        %1429 = vmatmul.bf16.gmra.mxu0 %v1130
        %v1430 = vpop.f32.mrf.mxu0
        %v1431 = vadd.f32 %v1342, %v1430
        %v1432 = vpop.f32.mrf.mxu0
        %v1433 = vadd.f32 %v1344, %v1432
        %1434 = vmatmul.bf16.gmra.mxu0 %v1132
        %v1435 = vpop.f32.mrf.mxu0
        %v1436 = vadd.f32 %v1347, %v1435
        %v1437 = vpop.f32.mrf.mxu0
        %v1438 = vadd.f32 %v1349, %v1437
        %1439 = vmatmul.bf16.gmra.mxu0 %v1134
        %v1440 = vpop.f32.mrf.mxu0
        %v1441 = vadd.f32 %v1352, %v1440
        %v1442 = vpop.f32.mrf.mxu0
        %v1443 = vadd.f32 %v1354, %v1442
        %1444 = vdwg.mxu0
        %v1445 = vmax.f32 %v1366, 0.0
        %v1446 = vmax.f32 %v1368, 0.0
        %v1447 = vmax.f32 %v1371, 0.0
        %v1448 = vmax.f32 %v1373, 0.0
        %v1449 = vmax.f32 %v1376, 0.0
        %v1450 = vmax.f32 %v1378, 0.0
        %v1451 = vmax.f32 %v1381, 0.0
        %v1452 = vmax.f32 %v1383, 0.0
        %v1453 = vmax.f32 %v1386, 0.0
        %v1454 = vmax.f32 %v1388, 0.0
        %v1455 = vmax.f32 %v1391, 0.0
        %v1456 = vmax.f32 %v1393, 0.0
        %v1457 = vmax.f32 %v1396, 0.0
        %v1458 = vmax.f32 %v1398, 0.0
        %v1459 = vmax.f32 %v1401, 0.0
        %v1460 = vmax.f32 %v1403, 0.0
        %v1461 = vmax.f32 %v1406, 0.0
        %v1462 = vmax.f32 %v1408, 0.0
        %v1463 = vmax.f32 %v1411, 0.0
        %v1464 = vmax.f32 %v1413, 0.0
        %v1465 = vmax.f32 %v1416, 0.0
        %v1466 = vmax.f32 %v1418, 0.0
        %v1467 = vmax.f32 %v1421, 0.0
        %v1468 = vmax.f32 %v1423, 0.0
        %v1469 = vmax.f32 %v1426, 0.0
        %v1470 = vmax.f32 %v1428, 0.0
        %v1471 = vmax.f32 %v1431, 0.0
        %v1472 = vmax.f32 %v1433, 0.0
        %v1473 = vmax.f32 %v1436, 0.0
        %v1474 = vmax.f32 %v1438, 0.0
        %v1475 = vmax.f32 %v1441, 0.0
        %v1476 = vmax.f32 %v1443, 0.0
        %v1477 = vpack.c.bf16 %v1446, %v1445
        %v1478 = vpack.c.bf16 %v1448, %v1447
        %v1479 = vpack.c.bf16 %v1450, %v1449
        %v1480 = vpack.c.bf16 %v1452, %v1451
        %v1481 = vpack.c.bf16 %v1454, %v1453
        %v1482 = vpack.c.bf16 %v1456, %v1455
        %v1483 = vpack.c.bf16 %v1458, %v1457
        %v1484 = vpack.c.bf16 %v1460, %v1459
        %v1485 = vpack.c.bf16 %v1462, %v1461
        %v1486 = vpack.c.bf16 %v1464, %v1463
        %v1487 = vpack.c.bf16 %v1466, %v1465
        %v1488 = vpack.c.bf16 %v1468, %v1467
        %v1489 = vpack.c.bf16 %v1470, %v1469
        %v1490 = vpack.c.bf16 %v1472, %v1471
        %v1491 = vpack.c.bf16 %v1474, %v1473
        %v1492 = vpack.c.bf16 %v1476, %v1475
        %v1493 = vld [vmem:[%s6] sm:$0xf]
        %v1494 = vld [vmem:[%s6 + $0x4] sm:$0xf]
        %v1495 = vld [vmem:[%s6 + $0x8] sm:$0xf]
        %v1496 = vld [vmem:[%s6 + $0xc] sm:$0xf]
        %v1497 = vld [vmem:[%s6 + $0x10] sm:$0xf]
        %v1498 = vld [vmem:[%s6 + $0x14] sm:$0xf]
        %v1499 = vld [vmem:[%s6 + $0x18] sm:$0xf]
        %v1500 = vld [vmem:[%s6 + $0x1c] sm:$0xf]
        %v1501 = vld [vmem:[%s7] sm:$0x1]
        %v1503 = vperm.slane %v1501, 0
        %v1513 = vunpack.c.l.b16 %v1493
        %v1514 = vunpack.c.l.b16 %v1494
        %v1515 = vunpack.c.l.b16 %v1495
        %v1516 = vunpack.c.l.b16 %v1496
        %v1517 = vunpack.c.l.b16 %v1497
        %v1518 = vunpack.c.l.b16 %v1498
        %v1519 = vunpack.c.l.b16 %v1499
        %v1520 = vunpack.c.l.b16 %v1500
        %v1521 = vpack.c.b16 %v1514, %v1513
        %v1522 = vpack.c.b16 %v1516, %v1515
        %v1523 = vpack.c.b16 %v1518, %v1517
        %v1524 = vpack.c.b16 %v1520, %v1519
        %vm1529 = vcmask 523264
        %v1531 = vsel %vm1529, %v1477, 0
        %v1534 = vsel %vm1529, %v1478, 0
        %v1537 = vsel %vm1529, %v1479, 0
        %v1540 = vsel %vm1529, %v1480, 0
        %v1543 = vsel %vm1529, %v1481, 0
        %v1546 = vsel %vm1529, %v1482, 0
        %v1549 = vsel %vm1529, %v1483, 0
        %v1552 = vsel %vm1529, %v1484, 0
        %v1555 = vsel %vm1529, %v1485, 0
        %v1558 = vsel %vm1529, %v1486, 0
        %v1561 = vsel %vm1529, %v1487, 0
        %v1564 = vsel %vm1529, %v1488, 0
        %v1567 = vsel %vm1529, %v1489, 0
        %v1570 = vsel %vm1529, %v1490, 0
        %v1573 = vsel %vm1529, %v1491, 0
        %v1576 = vsel %vm1529, %v1492, 0
        %1578 = vmatpush.bf16.msra.mxu0 0
        %1579 = vmatpush.bf16.msra.mxu0 0
        %1580 = vmatpush.bf16.msra.mxu0 0
        %1581 = vmatpush.bf16.msra.mxu0 0
        %1582 = vmatpush.bf16.msra.mxu0 %v1524
        %1583 = vmatpush.bf16.msra.mxu0 %v1523
        %1584 = vmatpush.bf16.msra.mxu0 %v1522
        %1585 = vmatpush.bf16.msra.mxu0 %v1521
        %1586 = vmatmul.bf16.gmra.mxu0 %v1531
        %v1587 = vpop.f32.mrf.mxu0
        %v1588 = vadd.f32 %v1503, %v1587
        %v1589 = vpop.f32.mrf.mxu0
        %v1590 = vadd.f32 %v1503, %v1589
        %1591 = vmatmul.bf16.gmra.mxu0 %v1534
        %v1592 = vpop.f32.mrf.mxu0
        %v1593 = vadd.f32 %v1503, %v1592
        %v1594 = vpop.f32.mrf.mxu0
        %v1595 = vadd.f32 %v1503, %v1594
        %1596 = vmatmul.bf16.gmra.mxu0 %v1537
        %v1597 = vpop.f32.mrf.mxu0
        %v1598 = vadd.f32 %v1503, %v1597
        %v1599 = vpop.f32.mrf.mxu0
        %v1600 = vadd.f32 %v1503, %v1599
        %1601 = vmatmul.bf16.gmra.mxu0 %v1540
        %v1602 = vpop.f32.mrf.mxu0
        %v1603 = vadd.f32 %v1503, %v1602
        %v1604 = vpop.f32.mrf.mxu0
        %v1605 = vadd.f32 %v1503, %v1604
        %1606 = vmatmul.bf16.gmra.mxu0 %v1543
        %v1607 = vpop.f32.mrf.mxu0
        %v1608 = vadd.f32 %v1503, %v1607
        %v1609 = vpop.f32.mrf.mxu0
        %v1610 = vadd.f32 %v1503, %v1609
        %1611 = vmatmul.bf16.gmra.mxu0 %v1546
        %v1612 = vpop.f32.mrf.mxu0
        %v1613 = vadd.f32 %v1503, %v1612
        %v1614 = vpop.f32.mrf.mxu0
        %v1615 = vadd.f32 %v1503, %v1614
        %1616 = vmatmul.bf16.gmra.mxu0 %v1549
        %v1617 = vpop.f32.mrf.mxu0
        %v1618 = vadd.f32 %v1503, %v1617
        %v1619 = vpop.f32.mrf.mxu0
        %v1620 = vadd.f32 %v1503, %v1619
        %1621 = vmatmul.bf16.gmra.mxu0 %v1552
        %v1622 = vpop.f32.mrf.mxu0
        %v1623 = vadd.f32 %v1503, %v1622
        %v1624 = vpop.f32.mrf.mxu0
        %v1625 = vadd.f32 %v1503, %v1624
        %1626 = vmatmul.bf16.gmra.mxu0 %v1555
        %v1627 = vpop.f32.mrf.mxu0
        %v1628 = vadd.f32 %v1503, %v1627
        %v1629 = vpop.f32.mrf.mxu0
        %v1630 = vadd.f32 %v1503, %v1629
        %1631 = vmatmul.bf16.gmra.mxu0 %v1558
        %v1632 = vpop.f32.mrf.mxu0
        %v1633 = vadd.f32 %v1503, %v1632
        %v1634 = vpop.f32.mrf.mxu0
        %v1635 = vadd.f32 %v1503, %v1634
        %1636 = vmatmul.bf16.gmra.mxu0 %v1561
        %v1637 = vpop.f32.mrf.mxu0
        %v1638 = vadd.f32 %v1503, %v1637
        %v1639 = vpop.f32.mrf.mxu0
        %v1640 = vadd.f32 %v1503, %v1639
        %1641 = vmatmul.bf16.gmra.mxu0 %v1564
        %v1642 = vpop.f32.mrf.mxu0
        %v1643 = vadd.f32 %v1503, %v1642
        %v1644 = vpop.f32.mrf.mxu0
        %v1645 = vadd.f32 %v1503, %v1644
        %1646 = vmatmul.bf16.gmra.mxu0 %v1567
        %v1647 = vpop.f32.mrf.mxu0
        %v1648 = vadd.f32 %v1503, %v1647
        %v1649 = vpop.f32.mrf.mxu0
        %v1650 = vadd.f32 %v1503, %v1649
        %1651 = vmatmul.bf16.gmra.mxu0 %v1570
        %v1652 = vpop.f32.mrf.mxu0
        %v1653 = vadd.f32 %v1503, %v1652
        %v1654 = vpop.f32.mrf.mxu0
        %v1655 = vadd.f32 %v1503, %v1654
        %1656 = vmatmul.bf16.gmra.mxu0 %v1573
        %v1657 = vpop.f32.mrf.mxu0
        %v1658 = vadd.f32 %v1503, %v1657
        %v1659 = vpop.f32.mrf.mxu0
        %v1660 = vadd.f32 %v1503, %v1659
        %1661 = vmatmul.bf16.gmra.mxu0 %v1576
        %v1662 = vpop.f32.mrf.mxu0
        %v1663 = vadd.f32 %v1503, %v1662
        %v1664 = vpop.f32.mrf.mxu0
        %v1665 = vadd.f32 %v1503, %v1664
        %1666 = vdwg.mxu0
        %vm1667 = vcmask 48128
        %v1668 = vsel %vm1667, %v1588, -inf
        %1669 = vmax.xlane.f32.xlu0 %v1668
        %v1670 = vpop.xlane.xlu0 %1669
        %v1671 = vsel %vm1667, %v1590, -inf
        %1672 = vmax.xlane.f32.xlu0 %v1671
        %v1673 = vpop.xlane.xlu0 %1672
        %v1674 = vsel %vm1667, %v1593, -inf
        %1675 = vmax.xlane.f32.xlu0 %v1674
        %v1676 = vpop.xlane.xlu0 %1675
        %v1677 = vsel %vm1667, %v1595, -inf
        %1678 = vmax.xlane.f32.xlu0 %v1677
        %v1679 = vpop.xlane.xlu0 %1678
        %v1680 = vsel %vm1667, %v1598, -inf
        %1681 = vmax.xlane.f32.xlu0 %v1680
        %v1682 = vpop.xlane.xlu0 %1681
        %v1683 = vsel %vm1667, %v1600, -inf
        %1684 = vmax.xlane.f32.xlu0 %v1683
        %v1685 = vpop.xlane.xlu0 %1684
        %v1686 = vsel %vm1667, %v1603, -inf
        %1687 = vmax.xlane.f32.xlu0 %v1686
        %v1688 = vpop.xlane.xlu0 %1687
        %v1689 = vsel %vm1667, %v1605, -inf
        %1690 = vmax.xlane.f32.xlu0 %v1689
        %v1691 = vpop.xlane.xlu0 %1690
        %v1692 = vsel %vm1667, %v1608, -inf
        %1693 = vmax.xlane.f32.xlu0 %v1692
        %v1694 = vpop.xlane.xlu0 %1693
        %v1695 = vsel %vm1667, %v1610, -inf
        %1696 = vmax.xlane.f32.xlu0 %v1695
        %v1697 = vpop.xlane.xlu0 %1696
        %v1698 = vsel %vm1667, %v1613, -inf
        %1699 = vmax.xlane.f32.xlu0 %v1698
        %v1700 = vpop.xlane.xlu0 %1699
        %v1701 = vsel %vm1667, %v1615, -inf
        %1702 = vmax.xlane.f32.xlu0 %v1701
        %v1703 = vpop.xlane.xlu0 %1702
        %v1704 = vsel %vm1667, %v1618, -inf
        %1705 = vmax.xlane.f32.xlu0 %v1704
        %v1706 = vpop.xlane.xlu0 %1705
        %v1707 = vsel %vm1667, %v1620, -inf
        %1708 = vmax.xlane.f32.xlu0 %v1707
        %v1709 = vpop.xlane.xlu0 %1708
        %v1710 = vsel %vm1667, %v1623, -inf
        %1711 = vmax.xlane.f32.xlu0 %v1710
        %v1712 = vpop.xlane.xlu0 %1711
        %v1713 = vsel %vm1667, %v1625, -inf
        %1714 = vmax.xlane.f32.xlu0 %v1713
        %v1715 = vpop.xlane.xlu0 %1714
        %v1716 = vsel %vm1667, %v1628, -inf
        %1717 = vmax.xlane.f32.xlu0 %v1716
        %v1718 = vpop.xlane.xlu0 %1717
        %v1719 = vsel %vm1667, %v1630, -inf
        %1720 = vmax.xlane.f32.xlu0 %v1719
        %v1721 = vpop.xlane.xlu0 %1720
        %v1722 = vsel %vm1667, %v1633, -inf
        %1723 = vmax.xlane.f32.xlu0 %v1722
        %v1724 = vpop.xlane.xlu0 %1723
        %v1725 = vsel %vm1667, %v1635, -inf
        %1726 = vmax.xlane.f32.xlu0 %v1725
        %v1727 = vpop.xlane.xlu0 %1726
        %v1728 = vsel %vm1667, %v1638, -inf
        %1729 = vmax.xlane.f32.xlu0 %v1728
        %v1730 = vpop.xlane.xlu0 %1729
        %v1731 = vsel %vm1667, %v1640, -inf
        %1732 = vmax.xlane.f32.xlu0 %v1731
        %v1733 = vpop.xlane.xlu0 %1732
        %v1734 = vsel %vm1667, %v1643, -inf
        %1735 = vmax.xlane.f32.xlu0 %v1734
        %v1736 = vpop.xlane.xlu0 %1735
        %v1737 = vsel %vm1667, %v1645, -inf
        %1738 = vmax.xlane.f32.xlu0 %v1737
        %v1739 = vpop.xlane.xlu0 %1738
        %v1740 = vsel %vm1667, %v1648, -inf
        %1741 = vmax.xlane.f32.xlu0 %v1740
        %v1742 = vpop.xlane.xlu0 %1741
        %v1743 = vsel %vm1667, %v1650, -inf
        %1744 = vmax.xlane.f32.xlu0 %v1743
        %v1745 = vpop.xlane.xlu0 %1744
        %v1746 = vsel %vm1667, %v1653, -inf
        %1747 = vmax.xlane.f32.xlu0 %v1746
        %v1748 = vpop.xlane.xlu0 %1747
        %v1749 = vsel %vm1667, %v1655, -inf
        %1750 = vmax.xlane.f32.xlu0 %v1749
        %v1751 = vpop.xlane.xlu0 %1750
        %v1752 = vsel %vm1667, %v1658, -inf
        %1753 = vmax.xlane.f32.xlu0 %v1752
        %v1754 = vpop.xlane.xlu0 %1753
        %v1755 = vsel %vm1667, %v1660, -inf
        %1756 = vmax.xlane.f32.xlu0 %v1755
        %v1757 = vpop.xlane.xlu0 %1756
        %v1758 = vsel %vm1667, %v1663, -inf
        %1759 = vmax.xlane.f32.xlu0 %v1758
        %v1760 = vpop.xlane.xlu0 %1759
        %v1761 = vsel %vm1667, %v1665, -inf
        %1762 = vmax.xlane.f32.xlu0 %v1761
        %v1763 = vpop.xlane.xlu0 %1762
        %v1764 = vsub.f32 %v1588, %v1670
        %v1765 = vsub.f32 %v1590, %v1673
        %v1766 = vsub.f32 %v1593, %v1676
        %v1767 = vsub.f32 %v1595, %v1679
        %v1768 = vsub.f32 %v1598, %v1682
        %v1769 = vsub.f32 %v1600, %v1685
        %v1770 = vsub.f32 %v1603, %v1688
        %v1771 = vsub.f32 %v1605, %v1691
        %v1772 = vsub.f32 %v1608, %v1694
        %v1773 = vsub.f32 %v1610, %v1697
        %v1774 = vsub.f32 %v1613, %v1700
        %v1775 = vsub.f32 %v1615, %v1703
        %v1776 = vsub.f32 %v1618, %v1706
        %v1777 = vsub.f32 %v1620, %v1709
        %v1778 = vsub.f32 %v1623, %v1712
        %v1779 = vsub.f32 %v1625, %v1715
        %v1780 = vsub.f32 %v1628, %v1718
        %v1781 = vsub.f32 %v1630, %v1721
        %v1782 = vsub.f32 %v1633, %v1724
        %v1783 = vsub.f32 %v1635, %v1727
        %v1784 = vsub.f32 %v1638, %v1730
        %v1785 = vsub.f32 %v1640, %v1733
        %v1786 = vsub.f32 %v1643, %v1736
        %v1787 = vsub.f32 %v1645, %v1739
        %v1788 = vsub.f32 %v1648, %v1742
        %v1789 = vsub.f32 %v1650, %v1745
        %v1790 = vsub.f32 %v1653, %v1748
        %v1791 = vsub.f32 %v1655, %v1751
        %v1792 = vsub.f32 %v1658, %v1754
        %v1793 = vsub.f32 %v1660, %v1757
        %v1794 = vsub.f32 %v1663, %v1760
        %v1795 = vsub.f32 %v1665, %v1763
        %v1796 = vmul.f32 %v1764, 1.442695
        %v1797 = vpow.pop %v1796
        %v1798 = vmul.f32 %v1765, 1.442695
        %v1799 = vpow.pop %v1798
        %v1800 = vmul.f32 %v1766, 1.442695
        %v1801 = vpow.pop %v1800
        %v1802 = vmul.f32 %v1767, 1.442695
        %v1803 = vpow.pop %v1802
        %v1804 = vmul.f32 %v1768, 1.442695
        %v1805 = vpow.pop %v1804
        %v1806 = vmul.f32 %v1769, 1.442695
        %v1807 = vpow.pop %v1806
        %v1808 = vmul.f32 %v1770, 1.442695
        %v1809 = vpow.pop %v1808
        %v1810 = vmul.f32 %v1771, 1.442695
        %v1811 = vpow.pop %v1810
        %v1812 = vmul.f32 %v1772, 1.442695
        %v1813 = vpow.pop %v1812
        %v1814 = vmul.f32 %v1773, 1.442695
        %v1815 = vpow.pop %v1814
        %v1816 = vmul.f32 %v1774, 1.442695
        %v1817 = vpow.pop %v1816
        %v1818 = vmul.f32 %v1775, 1.442695
        %v1819 = vpow.pop %v1818
        %v1820 = vmul.f32 %v1776, 1.442695
        %v1821 = vpow.pop %v1820
        %v1822 = vmul.f32 %v1777, 1.442695
        %v1823 = vpow.pop %v1822
        %v1824 = vmul.f32 %v1778, 1.442695
        %v1825 = vpow.pop %v1824
        %v1826 = vmul.f32 %v1779, 1.442695
        %v1827 = vpow.pop %v1826
        %v1828 = vmul.f32 %v1780, 1.442695
        %v1829 = vpow.pop %v1828
        %v1830 = vmul.f32 %v1781, 1.442695
        %v1831 = vpow.pop %v1830
        %v1832 = vmul.f32 %v1782, 1.442695
        %v1833 = vpow.pop %v1832
        %v1834 = vmul.f32 %v1783, 1.442695
        %v1835 = vpow.pop %v1834
        %v1836 = vmul.f32 %v1784, 1.442695
        %v1837 = vpow.pop %v1836
        %v1838 = vmul.f32 %v1785, 1.442695
        %v1839 = vpow.pop %v1838
        %v1840 = vmul.f32 %v1786, 1.442695
        %v1841 = vpow.pop %v1840
        %v1842 = vmul.f32 %v1787, 1.442695
        %v1843 = vpow.pop %v1842
        %v1844 = vmul.f32 %v1788, 1.442695
        %v1845 = vpow.pop %v1844
        %v1846 = vmul.f32 %v1789, 1.442695
        %v1847 = vpow.pop %v1846
        %v1848 = vmul.f32 %v1790, 1.442695
        %v1849 = vpow.pop %v1848
        %v1850 = vmul.f32 %v1791, 1.442695
        %v1851 = vpow.pop %v1850
        %v1852 = vmul.f32 %v1792, 1.442695
        %v1853 = vpow.pop %v1852
        %v1854 = vmul.f32 %v1793, 1.442695
        %v1855 = vpow.pop %v1854
        %v1856 = vmul.f32 %v1794, 1.442695
        %v1857 = vpow.pop %v1856
        %v1858 = vmul.f32 %v1795, 1.442695
        %v1859 = vpow.pop %v1858
        %v1860 = vsel %vm1667, %v1797, 0.0
        %1861 = vadd.xlane.f32.xlu0 %v1860
        %v1862 = vpop.xlane.xlu0 %1861
        %v1863 = vsel %vm1667, %v1799, 0.0
        %1864 = vadd.xlane.f32.xlu0 %v1863
        %v1865 = vpop.xlane.xlu0 %1864
        %v1866 = vsel %vm1667, %v1801, 0.0
        %1867 = vadd.xlane.f32.xlu0 %v1866
        %v1868 = vpop.xlane.xlu0 %1867
        %v1869 = vsel %vm1667, %v1803, 0.0
        %1870 = vadd.xlane.f32.xlu0 %v1869
        %v1871 = vpop.xlane.xlu0 %1870
        %v1872 = vsel %vm1667, %v1805, 0.0
        %1873 = vadd.xlane.f32.xlu0 %v1872
        %v1874 = vpop.xlane.xlu0 %1873
        %v1875 = vsel %vm1667, %v1807, 0.0
        %1876 = vadd.xlane.f32.xlu0 %v1875
        %v1877 = vpop.xlane.xlu0 %1876
        %v1878 = vsel %vm1667, %v1809, 0.0
        %1879 = vadd.xlane.f32.xlu0 %v1878
        %v1880 = vpop.xlane.xlu0 %1879
        %v1881 = vsel %vm1667, %v1811, 0.0
        %1882 = vadd.xlane.f32.xlu0 %v1881
        %v1883 = vpop.xlane.xlu0 %1882
        %v1884 = vsel %vm1667, %v1813, 0.0
        %1885 = vadd.xlane.f32.xlu0 %v1884
        %v1886 = vpop.xlane.xlu0 %1885
        %v1887 = vsel %vm1667, %v1815, 0.0
        %1888 = vadd.xlane.f32.xlu0 %v1887
        %v1889 = vpop.xlane.xlu0 %1888
        %v1890 = vsel %vm1667, %v1817, 0.0
        %1891 = vadd.xlane.f32.xlu0 %v1890
        %v1892 = vpop.xlane.xlu0 %1891
        %v1893 = vsel %vm1667, %v1819, 0.0
        %1894 = vadd.xlane.f32.xlu0 %v1893
        %v1895 = vpop.xlane.xlu0 %1894
        %v1896 = vsel %vm1667, %v1821, 0.0
        %1897 = vadd.xlane.f32.xlu0 %v1896
        %v1898 = vpop.xlane.xlu0 %1897
        %v1899 = vsel %vm1667, %v1823, 0.0
        %1900 = vadd.xlane.f32.xlu0 %v1899
        %v1901 = vpop.xlane.xlu0 %1900
        %v1902 = vsel %vm1667, %v1825, 0.0
        %1903 = vadd.xlane.f32.xlu0 %v1902
        %v1904 = vpop.xlane.xlu0 %1903
        %v1905 = vsel %vm1667, %v1827, 0.0
        %1906 = vadd.xlane.f32.xlu0 %v1905
        %v1907 = vpop.xlane.xlu0 %1906
        %v1908 = vsel %vm1667, %v1829, 0.0
        %1909 = vadd.xlane.f32.xlu0 %v1908
        %v1910 = vpop.xlane.xlu0 %1909
        %v1911 = vsel %vm1667, %v1831, 0.0
        %1912 = vadd.xlane.f32.xlu0 %v1911
        %v1913 = vpop.xlane.xlu0 %1912
        %v1914 = vsel %vm1667, %v1833, 0.0
        %1915 = vadd.xlane.f32.xlu0 %v1914
        %v1916 = vpop.xlane.xlu0 %1915
        %v1917 = vsel %vm1667, %v1835, 0.0
        %1918 = vadd.xlane.f32.xlu0 %v1917
        %v1919 = vpop.xlane.xlu0 %1918
        %v1920 = vsel %vm1667, %v1837, 0.0
        %1921 = vadd.xlane.f32.xlu0 %v1920
        %v1922 = vpop.xlane.xlu0 %1921
        %v1923 = vsel %vm1667, %v1839, 0.0
        %1924 = vadd.xlane.f32.xlu0 %v1923
        %v1925 = vpop.xlane.xlu0 %1924
        %v1926 = vsel %vm1667, %v1841, 0.0
        %1927 = vadd.xlane.f32.xlu0 %v1926
        %v1928 = vpop.xlane.xlu0 %1927
        %v1929 = vsel %vm1667, %v1843, 0.0
        %1930 = vadd.xlane.f32.xlu0 %v1929
        %v1931 = vpop.xlane.xlu0 %1930
        %v1932 = vsel %vm1667, %v1845, 0.0
        %1933 = vadd.xlane.f32.xlu0 %v1932
        %v1934 = vpop.xlane.xlu0 %1933
        %v1935 = vsel %vm1667, %v1847, 0.0
        %1936 = vadd.xlane.f32.xlu0 %v1935
        %v1937 = vpop.xlane.xlu0 %1936
        %v1938 = vsel %vm1667, %v1849, 0.0
        %1939 = vadd.xlane.f32.xlu0 %v1938
        %v1940 = vpop.xlane.xlu0 %1939
        %v1941 = vsel %vm1667, %v1851, 0.0
        %1942 = vadd.xlane.f32.xlu0 %v1941
        %v1943 = vpop.xlane.xlu0 %1942
        %v1944 = vsel %vm1667, %v1853, 0.0
        %1945 = vadd.xlane.f32.xlu0 %v1944
        %v1946 = vpop.xlane.xlu0 %1945
        %v1947 = vsel %vm1667, %v1855, 0.0
        %1948 = vadd.xlane.f32.xlu0 %v1947
        %v1949 = vpop.xlane.xlu0 %1948
        %v1950 = vsel %vm1667, %v1857, 0.0
        %1951 = vadd.xlane.f32.xlu0 %v1950
        %v1952 = vpop.xlane.xlu0 %1951
        %v1953 = vsel %vm1667, %v1859, 0.0
        %1954 = vadd.xlane.f32.xlu0 %v1953
        %v1955 = vpop.xlane.xlu0 %1954
        %v1956 = vlog2.pop %v1862
        %v1957 = vmul.f32 %v1956, 0.6931472
        %v1958 = vlog2.pop %v1865
        %v1959 = vmul.f32 %v1958, 0.6931472
        %v1960 = vlog2.pop %v1868
        %v1961 = vmul.f32 %v1960, 0.6931472
        %v1962 = vlog2.pop %v1871
        %v1963 = vmul.f32 %v1962, 0.6931472
        %v1964 = vlog2.pop %v1874
        %v1965 = vmul.f32 %v1964, 0.6931472
        %v1966 = vlog2.pop %v1877
        %v1967 = vmul.f32 %v1966, 0.6931472
        %v1968 = vlog2.pop %v1880
        %v1969 = vmul.f32 %v1968, 0.6931472
        %v1970 = vlog2.pop %v1883
        %v1971 = vmul.f32 %v1970, 0.6931472
        %v1972 = vlog2.pop %v1886
        %v1973 = vmul.f32 %v1972, 0.6931472
        %v1974 = vlog2.pop %v1889
        %v1975 = vmul.f32 %v1974, 0.6931472
        %v1976 = vlog2.pop %v1892
        %v1977 = vmul.f32 %v1976, 0.6931472
        %v1978 = vlog2.pop %v1895
        %v1979 = vmul.f32 %v1978, 0.6931472
        %v1980 = vlog2.pop %v1898
        %v1981 = vmul.f32 %v1980, 0.6931472
        %v1982 = vlog2.pop %v1901
        %v1983 = vmul.f32 %v1982, 0.6931472
        %v1984 = vlog2.pop %v1904
        %v1985 = vmul.f32 %v1984, 0.6931472
        %v1986 = vlog2.pop %v1907
        %v1987 = vmul.f32 %v1986, 0.6931472
        %v1988 = vlog2.pop %v1910
        %v1989 = vmul.f32 %v1988, 0.6931472
        %v1990 = vlog2.pop %v1913
        %v1991 = vmul.f32 %v1990, 0.6931472
        %v1992 = vlog2.pop %v1916
        %v1993 = vmul.f32 %v1992, 0.6931472
        %v1994 = vlog2.pop %v1919
        %v1995 = vmul.f32 %v1994, 0.6931472
        %v1996 = vlog2.pop %v1922
        %v1997 = vmul.f32 %v1996, 0.6931472
        %v1998 = vlog2.pop %v1925
        %v1999 = vmul.f32 %v1998, 0.6931472
        %v2000 = vlog2.pop %v1928
        %v2001 = vmul.f32 %v2000, 0.6931472
        %v2002 = vlog2.pop %v1931
        %v2003 = vmul.f32 %v2002, 0.6931472
        %v2004 = vlog2.pop %v1934
        %v2005 = vmul.f32 %v2004, 0.6931472
        %v2006 = vlog2.pop %v1937
        %v2007 = vmul.f32 %v2006, 0.6931472
        %v2008 = vlog2.pop %v1940
        %v2009 = vmul.f32 %v2008, 0.6931472
        %v2010 = vlog2.pop %v1943
        %v2011 = vmul.f32 %v2010, 0.6931472
        %v2012 = vlog2.pop %v1946
        %v2013 = vmul.f32 %v2012, 0.6931472
        %v2014 = vlog2.pop %v1949
        %v2015 = vmul.f32 %v2014, 0.6931472
        %v2016 = vlog2.pop %v1952
        %v2017 = vmul.f32 %v2016, 0.6931472
        %v2018 = vlog2.pop %v1955
        %v2019 = vmul.f32 %v2018, 0.6931472
        %v2020 = vsub.f32 %v1764, %v1957
        %v2021 = vsub.f32 %v1765, %v1959
        %v2022 = vsub.f32 %v1766, %v1961
        %v2023 = vsub.f32 %v1767, %v1963
        %v2024 = vsub.f32 %v1768, %v1965
        %v2025 = vsub.f32 %v1769, %v1967
        %v2026 = vsub.f32 %v1770, %v1969
        %v2027 = vsub.f32 %v1771, %v1971
        %v2028 = vsub.f32 %v1772, %v1973
        %v2029 = vsub.f32 %v1773, %v1975
        %v2030 = vsub.f32 %v1774, %v1977
        %v2031 = vsub.f32 %v1775, %v1979
        %v2032 = vsub.f32 %v1776, %v1981
        %v2033 = vsub.f32 %v1777, %v1983
        %v2034 = vsub.f32 %v1778, %v1985
        %v2035 = vsub.f32 %v1779, %v1987
        %v2036 = vsub.f32 %v1780, %v1989
        %v2037 = vsub.f32 %v1781, %v1991
        %v2038 = vsub.f32 %v1782, %v1993
        %v2039 = vsub.f32 %v1783, %v1995
        %v2040 = vsub.f32 %v1784, %v1997
        %v2041 = vsub.f32 %v1785, %v1999
        %v2042 = vsub.f32 %v1786, %v2001
        %v2043 = vsub.f32 %v1787, %v2003
        %v2044 = vsub.f32 %v1788, %v2005
        %v2045 = vsub.f32 %v1789, %v2007
        %v2046 = vsub.f32 %v1790, %v2009
        %v2047 = vsub.f32 %v1791, %v2011
        %v2048 = vsub.f32 %v1792, %v2013
        %v2049 = vsub.f32 %v1793, %v2015
        %v2050 = vsub.f32 %v1794, %v2017
        %v2051 = vsub.f32 %v1795, %v2019
        %v2052 = vld [vmem:[%s386] sm:$0xff]
        %v2053 = vld [vmem:[%s386 + $0x8] sm:$0xff]
        %v2054 = vld [vmem:[%s386 + $0x10] sm:$0xff]
        %v2055 = vld [vmem:[%s386 + $0x18] sm:$0xff]
        %v2056 = vld [vmem:[%s386 + $0x20] sm:$0xff]
        %v2057 = vld [vmem:[%s386 + $0x28] sm:$0xff]
        %v2058 = vld [vmem:[%s386 + $0x30] sm:$0xff]
        %v2059 = vld [vmem:[%s386 + $0x38] sm:$0xff]
        %v2060 = vld [vmem:[%s386 + $0x40] sm:$0xff]
        %v2061 = vld [vmem:[%s386 + $0x48] sm:$0xff]
        %v2062 = vld [vmem:[%s386 + $0x50] sm:$0xff]
        %v2063 = vld [vmem:[%s386 + $0x58] sm:$0xff]
        %v2064 = vld [vmem:[%s386 + $0x60] sm:$0xff]
        %v2065 = vld [vmem:[%s386 + $0x68] sm:$0xff]
        %v2066 = vld [vmem:[%s386 + $0x70] sm:$0xff]
        %v2067 = vld [vmem:[%s386 + $0x78] sm:$0xff]
        %v2068 = vld [vmem:[%s386 + $0x80] sm:$0xff]
        %v2069 = vld [vmem:[%s386 + $0x88] sm:$0xff]
        %v2070 = vld [vmem:[%s386 + $0x90] sm:$0xff]
        %v2071 = vld [vmem:[%s386 + $0x98] sm:$0xff]
        %v2072 = vld [vmem:[%s386 + $0xa0] sm:$0xff]
        %v2073 = vld [vmem:[%s386 + $0xa8] sm:$0xff]
        %v2074 = vld [vmem:[%s386 + $0xb0] sm:$0xff]
        %v2075 = vld [vmem:[%s386 + $0xb8] sm:$0xff]
        %v2076 = vld [vmem:[%s386 + $0xc0] sm:$0xff]
        %v2077 = vld [vmem:[%s386 + $0xc8] sm:$0xff]
        %v2078 = vld [vmem:[%s386 + $0xd0] sm:$0xff]
        %v2079 = vld [vmem:[%s386 + $0xd8] sm:$0xff]
        %v2080 = vld [vmem:[%s386 + $0xe0] sm:$0xff]
        %v2081 = vld [vmem:[%s386 + $0xe8] sm:$0xff]
        %v2082 = vld [vmem:[%s386 + $0xf0] sm:$0xff]
        %v2083 = vld [vmem:[%s386 + $0xf8] sm:$0xff]
        %vm2084 = vcmp.gt.s32.totalorder %v2052, 4294967295
        %vm2085 = vcmp.gt.s32.totalorder %v2053, 4294967295
        %vm2086 = vcmp.gt.s32.totalorder %v2054, 4294967295
        %vm2087 = vcmp.gt.s32.totalorder %v2055, 4294967295
        %vm2088 = vcmp.gt.s32.totalorder %v2056, 4294967295
        %vm2089 = vcmp.gt.s32.totalorder %v2057, 4294967295
        %vm2090 = vcmp.gt.s32.totalorder %v2058, 4294967295
        %vm2091 = vcmp.gt.s32.totalorder %v2059, 4294967295
        %vm2092 = vcmp.gt.s32.totalorder %v2060, 4294967295
        %vm2093 = vcmp.gt.s32.totalorder %v2061, 4294967295
        %vm2094 = vcmp.gt.s32.totalorder %v2062, 4294967295
        %vm2095 = vcmp.gt.s32.totalorder %v2063, 4294967295
        %vm2096 = vcmp.gt.s32.totalorder %v2064, 4294967295
        %vm2097 = vcmp.gt.s32.totalorder %v2065, 4294967295
        %vm2098 = vcmp.gt.s32.totalorder %v2066, 4294967295
        %vm2099 = vcmp.gt.s32.totalorder %v2067, 4294967295
        %vm2100 = vcmp.gt.s32.totalorder %v2068, 4294967295
        %vm2101 = vcmp.gt.s32.totalorder %v2069, 4294967295
        %vm2102 = vcmp.gt.s32.totalorder %v2070, 4294967295
        %vm2103 = vcmp.gt.s32.totalorder %v2071, 4294967295
        %vm2104 = vcmp.gt.s32.totalorder %v2072, 4294967295
        %vm2105 = vcmp.gt.s32.totalorder %v2073, 4294967295
        %vm2106 = vcmp.gt.s32.totalorder %v2074, 4294967295
        %vm2107 = vcmp.gt.s32.totalorder %v2075, 4294967295
        %vm2108 = vcmp.gt.s32.totalorder %v2076, 4294967295
        %vm2109 = vcmp.gt.s32.totalorder %v2077, 4294967295
        %vm2110 = vcmp.gt.s32.totalorder %v2078, 4294967295
        %vm2111 = vcmp.gt.s32.totalorder %v2079, 4294967295
        %vm2112 = vcmp.gt.s32.totalorder %v2080, 4294967295
        %vm2113 = vcmp.gt.s32.totalorder %v2081, 4294967295
        %vm2114 = vcmp.gt.s32.totalorder %v2082, 4294967295
        %vm2115 = vcmp.gt.s32.totalorder %v2083, 4294967295
        %v2116 = vsel %vm2084, %v2052, 0
        %v2117 = vsel %vm2085, %v2053, 0
        %v2118 = vsel %vm2086, %v2054, 0
        %v2119 = vsel %vm2087, %v2055, 0
        %v2120 = vsel %vm2088, %v2056, 0
        %v2121 = vsel %vm2089, %v2057, 0
        %v2122 = vsel %vm2090, %v2058, 0
        %v2123 = vsel %vm2091, %v2059, 0
        %v2124 = vsel %vm2092, %v2060, 0
        %v2125 = vsel %vm2093, %v2061, 0
        %v2126 = vsel %vm2094, %v2062, 0
        %v2127 = vsel %vm2095, %v2063, 0
        %v2128 = vsel %vm2096, %v2064, 0
        %v2129 = vsel %vm2097, %v2065, 0
        %v2130 = vsel %vm2098, %v2066, 0
        %v2131 = vsel %vm2099, %v2067, 0
        %v2132 = vsel %vm2100, %v2068, 0
        %v2133 = vsel %vm2101, %v2069, 0
        %v2134 = vsel %vm2102, %v2070, 0
        %v2135 = vsel %vm2103, %v2071, 0
        %v2136 = vsel %vm2104, %v2072, 0
        %v2137 = vsel %vm2105, %v2073, 0
        %v2138 = vsel %vm2106, %v2074, 0
        %v2139 = vsel %vm2107, %v2075, 0
        %v2140 = vsel %vm2108, %v2076, 0
        %v2141 = vsel %vm2109, %v2077, 0
        %v2142 = vsel %vm2110, %v2078, 0
        %v2143 = vsel %vm2111, %v2079, 0
        %v2144 = vsel %vm2112, %v2080, 0
        %v2145 = vsel %vm2113, %v2081, 0
        %v2146 = vsel %vm2114, %v2082, 0
        %v2147 = vsel %vm2115, %v2083, 0
        %v2148 = vlaneseq
        %v2149 = vand.u32 %v2148, 127
        %2150 = vset.pattern.permute.xlu0 0
        %2151 = vperm.xlu0 %2150, %v2116
        %v2152 = vpop.permute.xlu0 %2151
        %2153 = vset.pattern.permute.xlu0 0
        %2154 = vperm.xlu0 %2153, %v2117
        %v2155 = vpop.permute.xlu0 %2154
        %2156 = vset.pattern.permute.xlu0 0
        %2157 = vperm.xlu0 %2156, %v2118
        %v2158 = vpop.permute.xlu0 %2157
        %2159 = vset.pattern.permute.xlu0 0
        %2160 = vperm.xlu0 %2159, %v2119
        %v2161 = vpop.permute.xlu0 %2160
        %2162 = vset.pattern.permute.xlu0 0
        %2163 = vperm.xlu0 %2162, %v2120
        %v2164 = vpop.permute.xlu0 %2163
        %2165 = vset.pattern.permute.xlu0 0
        %2166 = vperm.xlu0 %2165, %v2121
        %v2167 = vpop.permute.xlu0 %2166
        %2168 = vset.pattern.permute.xlu0 0
        %2169 = vperm.xlu0 %2168, %v2122
        %v2170 = vpop.permute.xlu0 %2169
        %2171 = vset.pattern.permute.xlu0 0
        %2172 = vperm.xlu0 %2171, %v2123
        %v2173 = vpop.permute.xlu0 %2172
        %2174 = vset.pattern.permute.xlu0 0
        %2175 = vperm.xlu0 %2174, %v2124
        %v2176 = vpop.permute.xlu0 %2175
        %2177 = vset.pattern.permute.xlu0 0
        %2178 = vperm.xlu0 %2177, %v2125
        %v2179 = vpop.permute.xlu0 %2178
        %2180 = vset.pattern.permute.xlu0 0
        %2181 = vperm.xlu0 %2180, %v2126
        %v2182 = vpop.permute.xlu0 %2181
        %2183 = vset.pattern.permute.xlu0 0
        %2184 = vperm.xlu0 %2183, %v2127
        %v2185 = vpop.permute.xlu0 %2184
        %2186 = vset.pattern.permute.xlu0 0
        %2187 = vperm.xlu0 %2186, %v2128
        %v2188 = vpop.permute.xlu0 %2187
        %2189 = vset.pattern.permute.xlu0 0
        %2190 = vperm.xlu0 %2189, %v2129
        %v2191 = vpop.permute.xlu0 %2190
        %2192 = vset.pattern.permute.xlu0 0
        %2193 = vperm.xlu0 %2192, %v2130
        %v2194 = vpop.permute.xlu0 %2193
        %2195 = vset.pattern.permute.xlu0 0
        %2196 = vperm.xlu0 %2195, %v2131
        %v2197 = vpop.permute.xlu0 %2196
        %2198 = vset.pattern.permute.xlu0 0
        %2199 = vperm.xlu0 %2198, %v2132
        %v2200 = vpop.permute.xlu0 %2199
        %2201 = vset.pattern.permute.xlu0 0
        %2202 = vperm.xlu0 %2201, %v2133
        %v2203 = vpop.permute.xlu0 %2202
        %2204 = vset.pattern.permute.xlu0 0
        %2205 = vperm.xlu0 %2204, %v2134
        %v2206 = vpop.permute.xlu0 %2205
        %2207 = vset.pattern.permute.xlu0 0
        %2208 = vperm.xlu0 %2207, %v2135
        %v2209 = vpop.permute.xlu0 %2208
        %2210 = vset.pattern.permute.xlu0 0
        %2211 = vperm.xlu0 %2210, %v2136
        %v2212 = vpop.permute.xlu0 %2211
        %2213 = vset.pattern.permute.xlu0 0
        %2214 = vperm.xlu0 %2213, %v2137
        %v2215 = vpop.permute.xlu0 %2214
        %2216 = vset.pattern.permute.xlu0 0
        %2217 = vperm.xlu0 %2216, %v2138
        %v2218 = vpop.permute.xlu0 %2217
        %2219 = vset.pattern.permute.xlu0 0
        %2220 = vperm.xlu0 %2219, %v2139
        %v2221 = vpop.permute.xlu0 %2220
        %2222 = vset.pattern.permute.xlu0 0
        %2223 = vperm.xlu0 %2222, %v2140
        %v2224 = vpop.permute.xlu0 %2223
        %2225 = vset.pattern.permute.xlu0 0
        %2226 = vperm.xlu0 %2225, %v2141
        %v2227 = vpop.permute.xlu0 %2226
        %2228 = vset.pattern.permute.xlu0 0
        %2229 = vperm.xlu0 %2228, %v2142
        %v2230 = vpop.permute.xlu0 %2229
        %2231 = vset.pattern.permute.xlu0 0
        %2232 = vperm.xlu0 %2231, %v2143
        %v2233 = vpop.permute.xlu0 %2232
        %2234 = vset.pattern.permute.xlu0 0
        %2235 = vperm.xlu0 %2234, %v2144
        %v2236 = vpop.permute.xlu0 %2235
        %2237 = vset.pattern.permute.xlu0 0
        %2238 = vperm.xlu0 %2237, %v2145
        %v2239 = vpop.permute.xlu0 %2238
        %2240 = vset.pattern.permute.xlu0 0
        %2241 = vperm.xlu0 %2240, %v2146
        %v2242 = vpop.permute.xlu0 %2241
        %2243 = vset.pattern.permute.xlu0 0
        %2244 = vperm.xlu0 %2243, %v2147
        %v2245 = vpop.permute.xlu0 %2244
        %vm2246 = vcmp.eq.s32.totalorder %v2149, %v2152
        %vm2247 = vcmp.eq.s32.totalorder %v2149, %v2155
        %vm2248 = vcmp.eq.s32.totalorder %v2149, %v2158
        %vm2249 = vcmp.eq.s32.totalorder %v2149, %v2161
        %vm2250 = vcmp.eq.s32.totalorder %v2149, %v2164
        %vm2251 = vcmp.eq.s32.totalorder %v2149, %v2167
        %vm2252 = vcmp.eq.s32.totalorder %v2149, %v2170
        %vm2253 = vcmp.eq.s32.totalorder %v2149, %v2173
        %vm2254 = vcmp.eq.s32.totalorder %v2149, %v2176
        %vm2255 = vcmp.eq.s32.totalorder %v2149, %v2179
        %vm2256 = vcmp.eq.s32.totalorder %v2149, %v2182
        %vm2257 = vcmp.eq.s32.totalorder %v2149, %v2185
        %vm2258 = vcmp.eq.s32.totalorder %v2149, %v2188
        %vm2259 = vcmp.eq.s32.totalorder %v2149, %v2191
        %vm2260 = vcmp.eq.s32.totalorder %v2149, %v2194
        %vm2261 = vcmp.eq.s32.totalorder %v2149, %v2197
        %vm2262 = vcmp.eq.s32.totalorder %v2149, %v2200
        %vm2263 = vcmp.eq.s32.totalorder %v2149, %v2203
        %vm2264 = vcmp.eq.s32.totalorder %v2149, %v2206
        %vm2265 = vcmp.eq.s32.totalorder %v2149, %v2209
        %vm2266 = vcmp.eq.s32.totalorder %v2149, %v2212
        %vm2267 = vcmp.eq.s32.totalorder %v2149, %v2215
        %vm2268 = vcmp.eq.s32.totalorder %v2149, %v2218
        %vm2269 = vcmp.eq.s32.totalorder %v2149, %v2221
        %vm2270 = vcmp.eq.s32.totalorder %v2149, %v2224
        %vm2271 = vcmp.eq.s32.totalorder %v2149, %v2227
        %vm2272 = vcmp.eq.s32.totalorder %v2149, %v2230
        %vm2273 = vcmp.eq.s32.totalorder %v2149, %v2233
        %vm2274 = vcmp.eq.s32.totalorder %v2149, %v2236
        %vm2275 = vcmp.eq.s32.totalorder %v2149, %v2239
        %vm2276 = vcmp.eq.s32.totalorder %v2149, %v2242
        %vm2277 = vcmp.eq.s32.totalorder %v2149, %v2245
        %v2278 = vsel %vm2246, 1, 0
        %v2279 = vsel %vm2247, 1, 0
        %v2280 = vsel %vm2248, 1, 0
        %v2281 = vsel %vm2249, 1, 0
        %v2282 = vsel %vm2250, 1, 0
        %v2283 = vsel %vm2251, 1, 0
        %v2284 = vsel %vm2252, 1, 0
        %v2285 = vsel %vm2253, 1, 0
        %v2286 = vsel %vm2254, 1, 0
        %v2287 = vsel %vm2255, 1, 0
        %v2288 = vsel %vm2256, 1, 0
        %v2289 = vsel %vm2257, 1, 0
        %v2290 = vsel %vm2258, 1, 0
        %v2291 = vsel %vm2259, 1, 0
        %v2292 = vsel %vm2260, 1, 0
        %v2293 = vsel %vm2261, 1, 0
        %v2294 = vsel %vm2262, 1, 0
        %v2295 = vsel %vm2263, 1, 0
        %v2296 = vsel %vm2264, 1, 0
        %v2297 = vsel %vm2265, 1, 0
        %v2298 = vsel %vm2266, 1, 0
        %v2299 = vsel %vm2267, 1, 0
        %v2300 = vsel %vm2268, 1, 0
        %v2301 = vsel %vm2269, 1, 0
        %v2302 = vsel %vm2270, 1, 0
        %v2303 = vsel %vm2271, 1, 0
        %v2304 = vsel %vm2272, 1, 0
        %v2305 = vsel %vm2273, 1, 0
        %v2306 = vsel %vm2274, 1, 0
        %v2307 = vsel %vm2275, 1, 0
        %v2308 = vsel %vm2276, 1, 0
        %v2309 = vsel %vm2277, 1, 0
        %v2310 = vcvt.s32.f32 %v2278
        %v2311 = vcvt.s32.f32 %v2279
        %v2312 = vcvt.s32.f32 %v2280
        %v2313 = vcvt.s32.f32 %v2281
        %v2314 = vcvt.s32.f32 %v2282
        %v2315 = vcvt.s32.f32 %v2283
        %v2316 = vcvt.s32.f32 %v2284
        %v2317 = vcvt.s32.f32 %v2285
        %v2318 = vcvt.s32.f32 %v2286
        %v2319 = vcvt.s32.f32 %v2287
        %v2320 = vcvt.s32.f32 %v2288
        %v2321 = vcvt.s32.f32 %v2289
        %v2322 = vcvt.s32.f32 %v2290
        %v2323 = vcvt.s32.f32 %v2291
        %v2324 = vcvt.s32.f32 %v2292
        %v2325 = vcvt.s32.f32 %v2293
        %v2326 = vcvt.s32.f32 %v2294
        %v2327 = vcvt.s32.f32 %v2295
        %v2328 = vcvt.s32.f32 %v2296
        %v2329 = vcvt.s32.f32 %v2297
        %v2330 = vcvt.s32.f32 %v2298
        %v2331 = vcvt.s32.f32 %v2299
        %v2332 = vcvt.s32.f32 %v2300
        %v2333 = vcvt.s32.f32 %v2301
        %v2334 = vcvt.s32.f32 %v2302
        %v2335 = vcvt.s32.f32 %v2303
        %v2336 = vcvt.s32.f32 %v2304
        %v2337 = vcvt.s32.f32 %v2305
        %v2338 = vcvt.s32.f32 %v2306
        %v2339 = vcvt.s32.f32 %v2307
        %v2340 = vcvt.s32.f32 %v2308
        %v2341 = vcvt.s32.f32 %v2309
        %v2342 = vmul.f32 %v2310, %v2020
        %v2343 = vmul.f32 %v2311, %v2021
        %v2344 = vmul.f32 %v2312, %v2022
        %v2345 = vmul.f32 %v2313, %v2023
        %v2346 = vmul.f32 %v2314, %v2024
        %v2347 = vmul.f32 %v2315, %v2025
        %v2348 = vmul.f32 %v2316, %v2026
        %v2349 = vmul.f32 %v2317, %v2027
        %v2350 = vmul.f32 %v2318, %v2028
        %v2351 = vmul.f32 %v2319, %v2029
        %v2352 = vmul.f32 %v2320, %v2030
        %v2353 = vmul.f32 %v2321, %v2031
        %v2354 = vmul.f32 %v2322, %v2032
        %v2355 = vmul.f32 %v2323, %v2033
        %v2356 = vmul.f32 %v2324, %v2034
        %v2357 = vmul.f32 %v2325, %v2035
        %v2358 = vmul.f32 %v2326, %v2036
        %v2359 = vmul.f32 %v2327, %v2037
        %v2360 = vmul.f32 %v2328, %v2038
        %v2361 = vmul.f32 %v2329, %v2039
        %v2362 = vmul.f32 %v2330, %v2040
        %v2363 = vmul.f32 %v2331, %v2041
        %v2364 = vmul.f32 %v2332, %v2042
        %v2365 = vmul.f32 %v2333, %v2043
        %v2366 = vmul.f32 %v2334, %v2044
        %v2367 = vmul.f32 %v2335, %v2045
        %v2368 = vmul.f32 %v2336, %v2046
        %v2369 = vmul.f32 %v2337, %v2047
        %v2370 = vmul.f32 %v2338, %v2048
        %v2371 = vmul.f32 %v2339, %v2049
        %v2372 = vmul.f32 %v2340, %v2050
        %v2373 = vmul.f32 %v2341, %v2051
        %v2374 = vsel %vm1667, %v2342, 0.0
        %2375 = vadd.xlane.f32.xlu0 %v2374
        %v2376 = vpop.xlane.xlu0 %2375
        %v2377 = vsel %vm1667, %v2343, 0.0
        %2378 = vadd.xlane.f32.xlu0 %v2377
        %v2379 = vpop.xlane.xlu0 %2378
        %v2380 = vsel %vm1667, %v2344, 0.0
        %2381 = vadd.xlane.f32.xlu0 %v2380
        %v2382 = vpop.xlane.xlu0 %2381
        %v2383 = vsel %vm1667, %v2345, 0.0
        %2384 = vadd.xlane.f32.xlu0 %v2383
        %v2385 = vpop.xlane.xlu0 %2384
        %v2386 = vsel %vm1667, %v2346, 0.0
        %2387 = vadd.xlane.f32.xlu0 %v2386
        %v2388 = vpop.xlane.xlu0 %2387
        %v2389 = vsel %vm1667, %v2347, 0.0
        %2390 = vadd.xlane.f32.xlu0 %v2389
        %v2391 = vpop.xlane.xlu0 %2390
        %v2392 = vsel %vm1667, %v2348, 0.0
        %2393 = vadd.xlane.f32.xlu0 %v2392
        %v2394 = vpop.xlane.xlu0 %2393
        %v2395 = vsel %vm1667, %v2349, 0.0
        %2396 = vadd.xlane.f32.xlu0 %v2395
        %v2397 = vpop.xlane.xlu0 %2396
        %v2398 = vsel %vm1667, %v2350, 0.0
        %2399 = vadd.xlane.f32.xlu0 %v2398
        %v2400 = vpop.xlane.xlu0 %2399
        %v2401 = vsel %vm1667, %v2351, 0.0
        %2402 = vadd.xlane.f32.xlu0 %v2401
        %v2403 = vpop.xlane.xlu0 %2402
        %v2404 = vsel %vm1667, %v2352, 0.0
        %2405 = vadd.xlane.f32.xlu0 %v2404
        %v2406 = vpop.xlane.xlu0 %2405
        %v2407 = vsel %vm1667, %v2353, 0.0
        %2408 = vadd.xlane.f32.xlu0 %v2407
        %v2409 = vpop.xlane.xlu0 %2408
        %v2410 = vsel %vm1667, %v2354, 0.0
        %2411 = vadd.xlane.f32.xlu0 %v2410
        %v2412 = vpop.xlane.xlu0 %2411
        %v2413 = vsel %vm1667, %v2355, 0.0
        %2414 = vadd.xlane.f32.xlu0 %v2413
        %v2415 = vpop.xlane.xlu0 %2414
        %v2416 = vsel %vm1667, %v2356, 0.0
        %2417 = vadd.xlane.f32.xlu0 %v2416
        %v2418 = vpop.xlane.xlu0 %2417
        %v2419 = vsel %vm1667, %v2357, 0.0
        %2420 = vadd.xlane.f32.xlu0 %v2419
        %v2421 = vpop.xlane.xlu0 %2420
        %v2422 = vsel %vm1667, %v2358, 0.0
        %2423 = vadd.xlane.f32.xlu0 %v2422
        %v2424 = vpop.xlane.xlu0 %2423
        %v2425 = vsel %vm1667, %v2359, 0.0
        %2426 = vadd.xlane.f32.xlu0 %v2425
        %v2427 = vpop.xlane.xlu0 %2426
        %v2428 = vsel %vm1667, %v2360, 0.0
        %2429 = vadd.xlane.f32.xlu0 %v2428
        %v2430 = vpop.xlane.xlu0 %2429
        %v2431 = vsel %vm1667, %v2361, 0.0
        %2432 = vadd.xlane.f32.xlu0 %v2431
        %v2433 = vpop.xlane.xlu0 %2432
        %v2434 = vsel %vm1667, %v2362, 0.0
        %2435 = vadd.xlane.f32.xlu0 %v2434
        %v2436 = vpop.xlane.xlu0 %2435
        %v2437 = vsel %vm1667, %v2363, 0.0
        %2438 = vadd.xlane.f32.xlu0 %v2437
        %v2439 = vpop.xlane.xlu0 %2438
        %v2440 = vsel %vm1667, %v2364, 0.0
        %2441 = vadd.xlane.f32.xlu0 %v2440
        %v2442 = vpop.xlane.xlu0 %2441
        %v2443 = vsel %vm1667, %v2365, 0.0
        %2444 = vadd.xlane.f32.xlu0 %v2443
        %v2445 = vpop.xlane.xlu0 %2444
        %v2446 = vsel %vm1667, %v2366, 0.0
        %2447 = vadd.xlane.f32.xlu0 %v2446
        %v2448 = vpop.xlane.xlu0 %2447
        %v2449 = vsel %vm1667, %v2367, 0.0
        %2450 = vadd.xlane.f32.xlu0 %v2449
        %v2451 = vpop.xlane.xlu0 %2450
        %v2452 = vsel %vm1667, %v2368, 0.0
        %2453 = vadd.xlane.f32.xlu0 %v2452
        %v2454 = vpop.xlane.xlu0 %2453
        %v2455 = vsel %vm1667, %v2369, 0.0
        %2456 = vadd.xlane.f32.xlu0 %v2455
        %v2457 = vpop.xlane.xlu0 %2456
        %v2458 = vsel %vm1667, %v2370, 0.0
        %2459 = vadd.xlane.f32.xlu0 %v2458
        %v2460 = vpop.xlane.xlu0 %2459
        %v2461 = vsel %vm1667, %v2371, 0.0
        %2462 = vadd.xlane.f32.xlu0 %v2461
        %v2463 = vpop.xlane.xlu0 %2462
        %v2464 = vsel %vm1667, %v2372, 0.0
        %2465 = vadd.xlane.f32.xlu0 %v2464
        %v2466 = vpop.xlane.xlu0 %2465
        %v2467 = vsel %vm1667, %v2373, 0.0
        %2468 = vadd.xlane.f32.xlu0 %v2467
        %v2469 = vpop.xlane.xlu0 %2468
        %v2470 = vsub.f32 0.0, %v2376
        %v2471 = vsub.f32 0.0, %v2379
        %v2472 = vsub.f32 0.0, %v2382
        %v2473 = vsub.f32 0.0, %v2385
        %v2474 = vsub.f32 0.0, %v2388
        %v2475 = vsub.f32 0.0, %v2391
        %v2476 = vsub.f32 0.0, %v2394
        %v2477 = vsub.f32 0.0, %v2397
        %v2478 = vsub.f32 0.0, %v2400
        %v2479 = vsub.f32 0.0, %v2403
        %v2480 = vsub.f32 0.0, %v2406
        %v2481 = vsub.f32 0.0, %v2409
        %v2482 = vsub.f32 0.0, %v2412
        %v2483 = vsub.f32 0.0, %v2415
        %v2484 = vsub.f32 0.0, %v2418
        %v2485 = vsub.f32 0.0, %v2421
        %v2486 = vsub.f32 0.0, %v2424
        %v2487 = vsub.f32 0.0, %v2427
        %v2488 = vsub.f32 0.0, %v2430
        %v2489 = vsub.f32 0.0, %v2433
        %v2490 = vsub.f32 0.0, %v2436
        %v2491 = vsub.f32 0.0, %v2439
        %v2492 = vsub.f32 0.0, %v2442
        %v2493 = vsub.f32 0.0, %v2445
        %v2494 = vsub.f32 0.0, %v2448
        %v2495 = vsub.f32 0.0, %v2451
        %v2496 = vsub.f32 0.0, %v2454
        %v2497 = vsub.f32 0.0, %v2457
        %v2498 = vsub.f32 0.0, %v2460
        %v2499 = vsub.f32 0.0, %v2463
        %v2500 = vsub.f32 0.0, %v2466
        %v2501 = vsub.f32 0.0, %v2469
        %v2502 = vsel %vm2084, 1, 0
        %v2503 = vsel %vm2085, 1, 0
        %v2504 = vsel %vm2086, 1, 0
        %v2505 = vsel %vm2087, 1, 0
        %v2506 = vsel %vm2088, 1, 0
        %v2507 = vsel %vm2089, 1, 0
        %v2508 = vsel %vm2090, 1, 0
        %v2509 = vsel %vm2091, 1, 0
        %v2510 = vsel %vm2092, 1, 0
        %v2511 = vsel %vm2093, 1, 0
        %v2512 = vsel %vm2094, 1, 0
        %v2513 = vsel %vm2095, 1, 0
        %v2514 = vsel %vm2096, 1, 0
        %v2515 = vsel %vm2097, 1, 0
        %v2516 = vsel %vm2098, 1, 0
        %v2517 = vsel %vm2099, 1, 0
        %v2518 = vsel %vm2100, 1, 0
        %v2519 = vsel %vm2101, 1, 0
        %v2520 = vsel %vm2102, 1, 0
        %v2521 = vsel %vm2103, 1, 0
        %v2522 = vsel %vm2104, 1, 0
        %v2523 = vsel %vm2105, 1, 0
        %v2524 = vsel %vm2106, 1, 0
        %v2525 = vsel %vm2107, 1, 0
        %v2526 = vsel %vm2108, 1, 0
        %v2527 = vsel %vm2109, 1, 0
        %v2528 = vsel %vm2110, 1, 0
        %v2529 = vsel %vm2111, 1, 0
        %v2530 = vsel %vm2112, 1, 0
        %v2531 = vsel %vm2113, 1, 0
        %v2532 = vsel %vm2114, 1, 0
        %v2533 = vsel %vm2115, 1, 0
        %v2534 = vcvt.s32.f32 %v2502
        %v2535 = vcvt.s32.f32 %v2503
        %v2536 = vcvt.s32.f32 %v2504
        %v2537 = vcvt.s32.f32 %v2505
        %v2538 = vcvt.s32.f32 %v2506
        %v2539 = vcvt.s32.f32 %v2507
        %v2540 = vcvt.s32.f32 %v2508
        %v2541 = vcvt.s32.f32 %v2509
        %v2542 = vcvt.s32.f32 %v2510
        %v2543 = vcvt.s32.f32 %v2511
        %v2544 = vcvt.s32.f32 %v2512
        %v2545 = vcvt.s32.f32 %v2513
        %v2546 = vcvt.s32.f32 %v2514
        %v2547 = vcvt.s32.f32 %v2515
        %v2548 = vcvt.s32.f32 %v2516
        %v2549 = vcvt.s32.f32 %v2517
        %v2550 = vcvt.s32.f32 %v2518
        %v2551 = vcvt.s32.f32 %v2519
        %v2552 = vcvt.s32.f32 %v2520
        %v2553 = vcvt.s32.f32 %v2521
        %v2554 = vcvt.s32.f32 %v2522
        %v2555 = vcvt.s32.f32 %v2523
        %v2556 = vcvt.s32.f32 %v2524
        %v2557 = vcvt.s32.f32 %v2525
        %v2558 = vcvt.s32.f32 %v2526
        %v2559 = vcvt.s32.f32 %v2527
        %v2560 = vcvt.s32.f32 %v2528
        %v2561 = vcvt.s32.f32 %v2529
        %v2562 = vcvt.s32.f32 %v2530
        %v2563 = vcvt.s32.f32 %v2531
        %v2564 = vcvt.s32.f32 %v2532
        %v2565 = vcvt.s32.f32 %v2533
        %v2566 = vmul.f32 %v2470, %v2534
        %v2567 = vmul.f32 %v2471, %v2535
        %v2568 = vmul.f32 %v2472, %v2536
        %v2569 = vmul.f32 %v2473, %v2537
        %v2570 = vmul.f32 %v2474, %v2538
        %v2571 = vmul.f32 %v2475, %v2539
        %v2572 = vmul.f32 %v2476, %v2540
        %v2573 = vmul.f32 %v2477, %v2541
        %v2574 = vmul.f32 %v2478, %v2542
        %v2575 = vmul.f32 %v2479, %v2543
        %v2576 = vmul.f32 %v2480, %v2544
        %v2577 = vmul.f32 %v2481, %v2545
        %v2578 = vmul.f32 %v2482, %v2546
        %v2579 = vmul.f32 %v2483, %v2547
        %v2580 = vmul.f32 %v2484, %v2548
        %v2581 = vmul.f32 %v2485, %v2549
        %v2582 = vmul.f32 %v2486, %v2550
        %v2583 = vmul.f32 %v2487, %v2551
        %v2584 = vmul.f32 %v2488, %v2552
        %v2585 = vmul.f32 %v2489, %v2553
        %v2586 = vmul.f32 %v2490, %v2554
        %v2587 = vmul.f32 %v2491, %v2555
        %v2588 = vmul.f32 %v2492, %v2556
        %v2589 = vmul.f32 %v2493, %v2557
        %v2590 = vmul.f32 %v2494, %v2558
        %v2591 = vmul.f32 %v2495, %v2559
        %v2592 = vmul.f32 %v2496, %v2560
        %v2593 = vmul.f32 %v2497, %v2561
        %v2594 = vmul.f32 %v2498, %v2562
        %v2595 = vmul.f32 %v2499, %v2563
        %v2596 = vmul.f32 %v2500, %v2564
        %v2597 = vmul.f32 %v2501, %v2565
        %vm2598 = vcmask 7168
        %v2599 = vsel %vm2598, %v2566, 0.0
        %v2600 = vsel %vm2598, %v2567, 0.0
        %v2601 = vadd.f32 %v2599, %v2600
        %v2602 = vsel %vm2598, %v2568, 0.0
        %v2603 = vadd.f32 %v2601, %v2602
        %v2604 = vsel %vm2598, %v2569, 0.0
        %v2605 = vadd.f32 %v2603, %v2604
        %v2606 = vsel %vm2598, %v2570, 0.0
        %v2607 = vadd.f32 %v2605, %v2606
        %v2608 = vsel %vm2598, %v2571, 0.0
        %v2609 = vadd.f32 %v2607, %v2608
        %v2610 = vsel %vm2598, %v2572, 0.0
        %v2611 = vadd.f32 %v2609, %v2610
        %v2612 = vsel %vm2598, %v2573, 0.0
        %v2613 = vadd.f32 %v2611, %v2612
        %v2614 = vsel %vm2598, %v2574, 0.0
        %v2615 = vadd.f32 %v2613, %v2614
        %v2616 = vsel %vm2598, %v2575, 0.0
        %v2617 = vadd.f32 %v2615, %v2616
        %v2618 = vsel %vm2598, %v2576, 0.0
        %v2619 = vadd.f32 %v2617, %v2618
        %v2620 = vsel %vm2598, %v2577, 0.0
        %v2621 = vadd.f32 %v2619, %v2620
        %v2622 = vsel %vm2598, %v2578, 0.0
        %v2623 = vadd.f32 %v2621, %v2622
        %v2624 = vsel %vm2598, %v2579, 0.0
        %v2625 = vadd.f32 %v2623, %v2624
        %v2626 = vsel %vm2598, %v2580, 0.0
        %v2627 = vadd.f32 %v2625, %v2626
        %v2628 = vsel %vm2598, %v2581, 0.0
        %v2629 = vadd.f32 %v2627, %v2628
        %v2630 = vsel %vm2598, %v2582, 0.0
        %v2631 = vadd.f32 %v2629, %v2630
        %v2632 = vsel %vm2598, %v2583, 0.0
        %v2633 = vadd.f32 %v2631, %v2632
        %v2634 = vsel %vm2598, %v2584, 0.0
        %v2635 = vadd.f32 %v2633, %v2634
        %v2636 = vsel %vm2598, %v2585, 0.0
        %v2637 = vadd.f32 %v2635, %v2636
        %v2638 = vsel %vm2598, %v2586, 0.0
        %v2639 = vadd.f32 %v2637, %v2638
        %v2640 = vsel %vm2598, %v2587, 0.0
        %v2641 = vadd.f32 %v2639, %v2640
        %v2642 = vsel %vm2598, %v2588, 0.0
        %v2643 = vadd.f32 %v2641, %v2642
        %v2644 = vsel %vm2598, %v2589, 0.0
        %v2645 = vadd.f32 %v2643, %v2644
        %v2646 = vsel %vm2598, %v2590, 0.0
        %v2647 = vadd.f32 %v2645, %v2646
        %v2648 = vsel %vm2598, %v2591, 0.0
        %v2649 = vadd.f32 %v2647, %v2648
        %v2650 = vsel %vm2598, %v2592, 0.0
        %v2651 = vadd.f32 %v2649, %v2650
        %v2652 = vsel %vm2598, %v2593, 0.0
        %v2653 = vadd.f32 %v2651, %v2652
        %v2654 = vsel %vm2598, %v2594, 0.0
        %v2655 = vadd.f32 %v2653, %v2654
        %v2656 = vsel %vm2598, %v2595, 0.0
        %v2657 = vadd.f32 %v2655, %v2656
        %v2658 = vsel %vm2598, %v2596, 0.0
        %v2659 = vadd.f32 %v2657, %v2658
        %v2660 = vsel %vm2598, %v2597, 0.0
        %v2661 = vadd.f32 %v2659, %v2660
        %2662 = vadd.xlane.f32.xlu0 %v2661
        %v2663 = vpop.xlane.xlu0 %2662
        %v2664 = vrot.slane %v2663, 4
        %v2665 = vadd.f32 %v2663, %v2664
        %v2666 = vrot.slane %v2665, 2
        %v2667 = vadd.f32 %v2665, %v2666
        %v2668 = vrot.slane %v2667, 1
        %v2669 = vadd.f32 %v2667, %v2668
        %s2670 = vtos %v2669
        %v2671 = vsel %vm2598, %v2534, 0.0
        %v2672 = vsel %vm2598, %v2535, 0.0
        %v2673 = vadd.f32 %v2671, %v2672
        %v2674 = vsel %vm2598, %v2536, 0.0
        %v2675 = vadd.f32 %v2673, %v2674
        %v2676 = vsel %vm2598, %v2537, 0.0
        %v2677 = vadd.f32 %v2675, %v2676
        %v2678 = vsel %vm2598, %v2538, 0.0
        %v2679 = vadd.f32 %v2677, %v2678
        %v2680 = vsel %vm2598, %v2539, 0.0
        %v2681 = vadd.f32 %v2679, %v2680
        %v2682 = vsel %vm2598, %v2540, 0.0
        %v2683 = vadd.f32 %v2681, %v2682
        %v2684 = vsel %vm2598, %v2541, 0.0
        %v2685 = vadd.f32 %v2683, %v2684
        %v2686 = vsel %vm2598, %v2542, 0.0
        %v2687 = vadd.f32 %v2685, %v2686
        %v2688 = vsel %vm2598, %v2543, 0.0
        %v2689 = vadd.f32 %v2687, %v2688
        %v2690 = vsel %vm2598, %v2544, 0.0
        %v2691 = vadd.f32 %v2689, %v2690
        %v2692 = vsel %vm2598, %v2545, 0.0
        %v2693 = vadd.f32 %v2691, %v2692
        %v2694 = vsel %vm2598, %v2546, 0.0
        %v2695 = vadd.f32 %v2693, %v2694
        %v2696 = vsel %vm2598, %v2547, 0.0
        %v2697 = vadd.f32 %v2695, %v2696
        %v2698 = vsel %vm2598, %v2548, 0.0
        %v2699 = vadd.f32 %v2697, %v2698
        %v2700 = vsel %vm2598, %v2549, 0.0
        %v2701 = vadd.f32 %v2699, %v2700
        %v2702 = vsel %vm2598, %v2550, 0.0
        %v2703 = vadd.f32 %v2701, %v2702
        %v2704 = vsel %vm2598, %v2551, 0.0
        %v2705 = vadd.f32 %v2703, %v2704
        %v2706 = vsel %vm2598, %v2552, 0.0
        %v2707 = vadd.f32 %v2705, %v2706
        %v2708 = vsel %vm2598, %v2553, 0.0
        %v2709 = vadd.f32 %v2707, %v2708
        %v2710 = vsel %vm2598, %v2554, 0.0
        %v2711 = vadd.f32 %v2709, %v2710
        %v2712 = vsel %vm2598, %v2555, 0.0
        %v2713 = vadd.f32 %v2711, %v2712
        %v2714 = vsel %vm2598, %v2556, 0.0
        %v2715 = vadd.f32 %v2713, %v2714
        %v2716 = vsel %vm2598, %v2557, 0.0
        %v2717 = vadd.f32 %v2715, %v2716
        %v2718 = vsel %vm2598, %v2558, 0.0
        %v2719 = vadd.f32 %v2717, %v2718
        %v2720 = vsel %vm2598, %v2559, 0.0
        %v2721 = vadd.f32 %v2719, %v2720
        %v2722 = vsel %vm2598, %v2560, 0.0
        %v2723 = vadd.f32 %v2721, %v2722
        %v2724 = vsel %vm2598, %v2561, 0.0
        %v2725 = vadd.f32 %v2723, %v2724
        %v2726 = vsel %vm2598, %v2562, 0.0
        %v2727 = vadd.f32 %v2725, %v2726
        %v2728 = vsel %vm2598, %v2563, 0.0
        %v2729 = vadd.f32 %v2727, %v2728
        %v2730 = vsel %vm2598, %v2564, 0.0
        %v2731 = vadd.f32 %v2729, %v2730
        %v2732 = vsel %vm2598, %v2565, 0.0
        %v2733 = vadd.f32 %v2731, %v2732
        %2734 = vadd.xlane.f32.xlu0 %v2733
        %v2735 = vpop.xlane.xlu0 %2734
        %v2736 = vrot.slane %v2735, 4
        %v2737 = vadd.f32 %v2735, %v2736
        %v2738 = vrot.slane %v2737, 2
        %v2739 = vadd.f32 %v2737, %v2738
        %v2740 = vrot.slane %v2739, 1
        %v2741 = vadd.f32 %v2739, %v2740
        %s2742 = vtos %v2741
        %v2743 = vstv %s2670
        %2744 = vst [vmem:[%s373] sm:$0xff] %v2743
        %v2745 = vstv %s2742
        %2746 = vst [vmem:[%s380] sm:$0xff] %v2745
        %s2747 = sand.u32 %s216, 1
        %s2748 = scalar_lea.sflag [#allocation4], %s2747
        %s2749 = sand.u32 %s216, 1
        %s2750 = smul.addr %s2749, 8
        %s2751 = scalar_lea.vmem [#allocation5], %s2750
        %s2752 = sand.u32 %s242, 1
        %s2753 = scalar_lea.sflag [#allocation7], %s2752
        %s2754 = sand.u32 %s242, 1
        %s2755 = smul.addr %s2754, 8
        %s2756 = scalar_lea.vmem [#allocation6], %s2755
        // Predicated region
        $region57: #{tpu_custom_call.1} parent=51 // pred_check
          %p2757 = pneg %p226
        $region58: #{tpu_custom_call.1} parent=51 // pred_check_branch
          %2759 = sbr.rel (%p2757) target = $region60
        $region59: #{tpu_custom_call.1} parent=51 // pred_region
          %2761 = vsyncadd %s2748, 0
          %s2762 = smul.addr %s30, 8
          %s2763 = scalar_lea.hbm %s8, %s2762
          %s2765 = sshll.u32 %s2751, 4
          %s2766 = int_to_ptr.vmem [resolvable:$true] %s2765
          %s2767 = sshll.u32 %s2763, 4
          %s2768 = int_to_ptr.hbm [resolvable:$true] %s2767
          %2770 = dma.vmem_to_hbm [thread:$0]  %s2766, 128, %s2768, %s2748
        $region60: #{tpu_custom_call.1} parent=51 // pred_fallthru
          _
        // Predicated region
        $region61: #{tpu_custom_call.1} parent=51 // pred_check
          %p2771 = pneg %p252
        $region62: #{tpu_custom_call.1} parent=51 // pred_check_branch
          %2773 = sbr.rel (%p2771) target = $region64
        $region63: #{tpu_custom_call.1} parent=51 // pred_region
          %2775 = vsyncadd %s2753, 0
          %s2776 = smul.addr %s30, 8
          %s2777 = scalar_lea.hbm %s9, %s2776
          %s2779 = sshll.u32 %s2756, 4
          %s2780 = int_to_ptr.vmem [resolvable:$true] %s2779
          %s2781 = sshll.u32 %s2777, 4
          %s2782 = int_to_ptr.hbm [resolvable:$true] %s2781
          %2784 = dma.vmem_to_hbm [thread:$0]  %s2780, 128, %s2782, %s2753
        $region64: #{tpu_custom_call.1} parent=51 // pred_fallthru
          _
      $region52: #{tpu_custom_call.1} parent=5 // pred_fallthru
        _
      %p2785 = scmp.le.s32.totalorder 2, %s25
      // Predicated region
      $region65: #{tpu_custom_call.1} parent=5 // pred_check
        %p2786 = pneg %p2785
      $region66: #{tpu_custom_call.1} parent=5 // pred_check_branch
        %2788 = sbr.rel (%p2786) target = $region68
      $region67: #{tpu_custom_call.1} parent=5 // pred_region
        %s2789 = ssub.s32 %s25, 2
        // Predicated region
        $region69: #{tpu_custom_call.1} parent=67 // pred_check
          %p2790 = pneg %p232
        $region70: #{tpu_custom_call.1} parent=67 // pred_check_branch
          %2792 = sbr.rel (%p2790) target = $region72
        $region71: #{tpu_custom_call.1} parent=67 // pred_region
          %s2793 = sand.u32 %s217, 1
          %s2794 = scalar_lea.sflag [#allocation4], %s2793
          %s2795 = sand.u32 %s217, 1
          %s2796 = smul.addr %s2795, 8
          %s2797 = scalar_lea.vmem [#allocation5], %s2796
          %2799 = dma.done %s2794, 128
        $region72: #{tpu_custom_call.1} parent=67 // pred_fallthru
          _
        // Predicated region
        $region73: #{tpu_custom_call.1} parent=67 // pred_check
          %p2800 = pneg %p258
        $region74: #{tpu_custom_call.1} parent=67 // pred_check_branch
          %2802 = sbr.rel (%p2800) target = $region76
        $region75: #{tpu_custom_call.1} parent=67 // pred_region
          %s2803 = sand.u32 %s243, 1
          %s2804 = scalar_lea.sflag [#allocation7], %s2803
          %s2805 = sand.u32 %s243, 1
          %s2806 = smul.addr %s2805, 8
          %s2807 = scalar_lea.vmem [#allocation6], %s2806
          %2809 = dma.done %s2804, 128
        $region76: #{tpu_custom_call.1} parent=67 // pred_fallthru
          _
      $region68: #{tpu_custom_call.1} parent=5 // pred_fallthru
        _
    $region6: #{tpu_custom_call.1} parent=1 // loop_footer
      %s29 = sadd.s32 1, %s25
    $region7: #{tpu_custom_call.1} parent=1 // loop_footer_branch
      %24 = sbr.rel target = $region3
    $region8: #{tpu_custom_call.1} parent=1 // loop_exit
      _
    %2810 = vsyncpa [#allocation3], 1
    %s2811 = scalar_lea.sflag [#allocation3], 1
    %2812 = vsyncpa %s2811, 1
    %2813 = vsyncpa [#allocation4], 1
    %s2814 = scalar_lea.sflag [#allocation4], 1
    %2815 = vsyncpa %s2814, 1
    %2816 = vsyncpa [#allocation7], 1
    %s2817 = scalar_lea.sflag [#allocation7], 1
    %2818 = vsyncpa %s2817, 1

</llo_original>
